<compile_context>
chip_gen: v6e
topology: v6e:2x2x1
jax: 0.10.0
libtpu: 0.0.40
codegen_flags: <defaults>
</compile_context>

<pallas_src>
import functools
import math

import jax
import jax.numpy as jnp
from jax import lax
from jax.experimental import pallas as pl
from jax.experimental.pallas import tpu as pltpu

_MIB = 1024 * 1024


def _round_up(x, m):
    return ((x + m - 1) // m) * m


# ---------------------------------------------------------------------------
# Fused Pallas kernel: 3x3 stride-2 "valid" conv + bias + ReLU + Linear + PE
# for one (batch, time-tile) grid step.
# ---------------------------------------------------------------------------

def _fused_subsample_kernel(xp_ref, halo_ref, w_ref, b_ref, wl_ref, bl_ref,
                            pe_ref, o_ref, acc_ref, *, fc, f2, cin, cout,
                            xscale):
    """One (batch, time tile) step.

    xp_ref  : (1, tt, 2*fc) bf16   paired rows: lanes [0:fc] = input row 2p,
                                   lanes [fc:2fc] = input row 2p+1
    halo_ref: (1, 1, 1, fc) bf16   input row 2*tt*(tile+1) (even row after tile)
    w_ref   : (3, 3*cin, cout) bf16 conv weights per time tap kh, row = kw*cin+ci
    b_ref   : (1, f2*cout) f32     conv bias pre-tiled over output freq
    wl_ref  : (f2*cout, odim) bf16 Linear weight, rows in (freq, channel) order
    bl_ref  : (1, odim) f32        Linear bias
    pe_ref  : (tt, odim) f32       positional-encoding rows for this tile
    o_ref   : (1, tt, odim)        final output
    acc_ref : (tt, f2*cout) f32    conv accumulator scratch
    """
    kcin = 3 * cin

    # ---- time tap kh = 0 (input rows 2p): initializes the accumulator -----
    w0 = w_ref[0]                      # (3*cin, cout): MXU RHS resident for f2 dots
    for f in range(f2):
        lo = 2 * f * cin
        acc_ref[:, f * cout:(f + 1) * cout] = jnp.dot(
            xp_ref[0, :, lo:lo + kcin], w0, preferred_element_type=jnp.float32)

    # ---- time tap kh = 1 (input rows 2p + 1) -------------------------------
    w1 = w_ref[1]
    for f in range(f2):
        lo = fc + 2 * f * cin
        acc_ref[:, f * cout:(f + 1) * cout] += jnp.dot(
            xp_ref[0, :, lo:lo + kcin], w1, preferred_element_type=jnp.float32)

    # ---- time tap kh = 2 (input rows 2p + 2) -------------------------------
    # Row 2p+2 is the even half of paired row p+1: compute the response at
    # every even row of the tile and shift it up by one output row (f32
    # concatenate); the last output row's contribution comes from the halo.
    w2 = w_ref[2]
    halo = halo_ref[0, 0]              # (1, fc)
    for f in range(f2):
        lo = 2 * f * cin
        d2 = jnp.dot(xp_ref[0, :, lo:lo + kcin], w2,
                     preferred_element_type=jnp.float32)   # row q -> output q-1
        dh = jnp.dot(halo[:, lo:lo + kcin], w2,
                     preferred_element_type=jnp.float32)   # -> output row tt-1
        acc_ref[:, f * cout:(f + 1) * cout] += jnp.concatenate([d2[1:], dh],
                                                               axis=0)

    # ---- epilogue: conv bias + ReLU, Linear, xscale, positional encoding ---
    h = jnp.maximum(acc_ref[...] + b_ref[...], 0.0)        # (tt, f2*cout) f32
    y = jnp.dot(h.astype(wl_ref.dtype), wl_ref[...],
                preferred_element_type=jnp.float32)        # (tt, odim) f32
    y = (y + bl_ref[...]) * xscale + pe_ref[...]
    o_ref[0] = y.astype(o_ref.dtype)


# ---------------------------------------------------------------------------
# conv stage 1 (Cin = 1) -- intentionally left to XLA
# ---------------------------------------------------------------------------

def _conv1_relu_nhwc(x, w, b):
    """First Conv2d (Cin=1, 3x3, stride 2, valid) + ReLU; NHWC output, f32."""
    # TODO(synk): per perf review the Cin=1 / K=9 stage is left to XLA's conv
    # (an im2col MXU kernel would waste ~14x lane padding); its cost is tiny.
    xn = x[:, :, :, None]                                   # (B, T, idim, 1)
    wn = jnp.transpose(w, (2, 3, 1, 0))                     # (3, 3, 1, Cout) HWIO
    y = lax.conv_general_dilated(xn, wn, window_strides=(2, 2), padding="VALID",
                                 dimension_numbers=("NHWC", "HWIO", "NHWC"))
    return jnp.maximum(y + b[None, None, None, :], 0.0)


# ---------------------------------------------------------------------------
# positional encoding (ESPnet PositionalEncoding table)
# ---------------------------------------------------------------------------

def positional_encoding(length, d_model, dtype=jnp.float32):
    pos = jnp.arange(length, dtype=jnp.float32)[:, None]
    half = (d_model + 1) // 2
    div = jnp.exp(jnp.arange(half, dtype=jnp.float32) * 2.0
                  * -(math.log(10000.0) / d_model))
    pe = jnp.stack([jnp.sin(pos * div), jnp.cos(pos * div)], axis=-1)
    pe = pe.reshape(length, 2 * half)[:, :d_model]
    return pe.astype(dtype)


# ---------------------------------------------------------------------------
# VMEM budgeting / tile selection
# ---------------------------------------------------------------------------

def _vmem_capacity_bytes():
    try:
        return int(pltpu.get_tpu_info().vmem_capacity_bytes)
    except Exception:
        return 128 * _MIB


def _vmem_estimate_bytes(tt, fc, f2, cin, cout, odim):
    """Rough per-grid-step VMEM working set (double-buffered pipeline blocks)."""
    k = f2 * cout
    est = 2 * tt * (2 * fc) * 2            # paired input tile (x2 buffers, bf16)
    est += 2 * fc * 2                      # halo row
    est += 2 * 3 * (3 * cin) * cout * 2    # conv weights
    est += 2 * k * 4                       # tiled conv bias
    est += 2 * k * odim * 2                # linear weights
    est += 2 * odim * 4                    # linear bias
    est += 2 * tt * odim * 4               # positional encoding tile
    est += 2 * tt * odim * 4               # output tile
    est += tt * k * 4                      # f32 accumulator scratch
    est += tt * k * 6 + 4 * tt * cout * 4  # epilogue / loop temporaries (rough)
    return est


# ---------------------------------------------------------------------------
# full forward
# ---------------------------------------------------------------------------

def conv2d_subsampling(x, x_mask, params, *, time_tile=128):
    """ESPnet Conv2dSubsampling forward.

    x: (B, T, idim) float32, x_mask: (B, 1, T) bool or None.
    Returns ((B, T', odim), mask') with T' = ((T - 1)//2 - 1)//2.
    """
    w1, b1 = params["w1"], params["b1"]
    w2, b2 = params["w2"], params["b2"]
    w_out, b_out = params["w_out"], params["b_out"]
    odim = b_out.shape[0]
    Cout, Cin = w2.shape[0], w2.shape[1]

    # Stage 1 in f32 (XLA), then bf16 for the MXU-heavy fused stage.
    h1 = _conv1_relu_nhwc(x, w1, b1).astype(jnp.bfloat16)   # (B, T1, F1, Cin)
    B, T1, F1, _ = h1.shape
    T2 = (T1 - 3) // 2 + 1
    F2 = (F1 - 3) // 2 + 1
    assert T2 >= 1 and F2 >= 1, "input too short for two 3x3 stride-2 convs"
    assert w_out.shape == (odim, Cout * F2)
    FC = F1 * Cin
    K = F2 * Cout

    # Time-tile selection from a VMEM budget derived from chip capacity.
    cap = _vmem_capacity_bytes()
    budget = (3 * cap) // 4
    tt = _round_up(min(time_tile, _round_up(T2, 8)), 8)
    while tt > 8 and _vmem_estimate_bytes(tt, FC, F2, Cin, Cout, odim) > budget:
        tt = max(8, _round_up(tt // 2, 8))
    est = _vmem_estimate_bytes(tt, FC, F2, Cin, Cout, odim)
    vmem_limit = int(min(cap - 4 * _MIB, max(32 * _MIB, (3 * est) // 2)))

    nt = pl.cdiv(T2, tt)          # TODO(synk): for v7x prefer >=2 grid points
    T2p = nt * tt
    Tin = 2 * T2p

    hf = h1.reshape(B, T1, FC)                               # (freq, chan) on lanes

    # Halo: input row 2*tt*(ti+1) (needed only by each tile's last output row;
    # the clamped index is only hit when that row is padding).
    halo_idx = jnp.minimum(2 * tt * (jnp.arange(nt) + 1), T1 - 1)
    halo = jnp.take(hf, halo_idx, axis=1)[:, :, None, :]     # (B, nt, 1, FC)

    # Paired-row layout: rows 2p / 2p+1 side by side on the lane axis.
    # Explicitly pad/truncate so every block read is fully defined.
    if Tin > T1:
        hf = jnp.pad(hf, ((0, 0), (0, Tin - T1), (0, 0)))
    elif Tin < T1:
        hf = hf[:, :Tin]
    xp = hf.reshape(B, T2p, 2 * FC)

    # Torch conv weight (Cout, Cin, kh, kw) -> (kh, kw*Cin + ci, Cout).
    wk = jnp.transpose(w2, (2, 3, 1, 0)).reshape(3, 3 * Cin, Cout)
    wk = wk.astype(jnp.bfloat16)
    bk = jnp.tile(b2.astype(jnp.float32), F2).reshape(1, K)  # bias pre-tiled

    # PyTorch flattens conv features as (channel, freq); our lanes are
    # (freq, channel): permute the Linear weight rows accordingly.
    w_lin = jnp.transpose(w_out.reshape(odim, Cout, F2), (2, 1, 0))
    w_lin = w_lin.reshape(K, odim).astype(jnp.bfloat16)
    b_lin = b_out.reshape(1, odim).astype(jnp.float32)
    pe = positional_encoding(T2p, odim)                      # (T2p, odim) f32
    xscale = math.sqrt(float(odim))

    flops = 2 * B * T2p * F2 * 9 * Cin * Cout + 2 * B * T2p * K * odim
    bytes_accessed = ((xp.size + halo.size + wk.size + w_lin.size) * 2
                      + (bk.size + b_lin.size + pe.size) * 4
                      + B * T2p * odim * 4)

    # TODO(synk): if odim is not a multiple of 128 the per-freq lane slices /
    # stores are unaligned (masked); pad channels to 128 for peak throughput.
    # TODO(synk): constant-index-map operands (wk, bk, w_lin, b_lin) could be
    # single-buffered via pipeline_mode=pl.Buffered(1) to free VMEM headroom.
    kern = functools.partial(_fused_subsample_kernel, fc=FC, f2=F2, cin=Cin,
                             cout=Cout, xscale=xscale)
    out = pl.pallas_call(
        kern,
        out_shape=jax.ShapeDtypeStruct((B, T2p, odim), x.dtype),
        grid=(B, nt),
        in_specs=[
            pl.BlockSpec((1, tt, 2 * FC), lambda bi, ti: (bi, ti, 0)),
            pl.BlockSpec((1, 1, 1, FC), lambda bi, ti: (bi, ti, 0, 0)),
            pl.BlockSpec((3, 3 * Cin, Cout), lambda bi, ti: (0, 0, 0)),
            pl.BlockSpec((1, K), lambda bi, ti: (0, 0)),
            pl.BlockSpec((K, odim), lambda bi, ti: (0, 0)),
            pl.BlockSpec((1, odim), lambda bi, ti: (0, 0)),
            pl.BlockSpec((tt, odim), lambda bi, ti: (ti, 0)),
        ],
        out_specs=pl.BlockSpec((1, tt, odim), lambda bi, ti: (bi, ti, 0)),
        scratch_shapes=[pltpu.VMEM((tt, K), jnp.float32)],
        compiler_params=pltpu.CompilerParams(
            dimension_semantics=("parallel", "parallel"),
            vmem_limit_bytes=vmem_limit),
        cost_estimate=pl.CostEstimate(flops=flops, transcendentals=0,
                                      bytes_accessed=bytes_accessed),
    )(xp, halo, wk, bk, w_lin, b_lin, pe)

    out = out[:, :T2]
    # TODO(synk): Dropout inside PositionalEncoding is identity here (eval mode).
    if x_mask is None:
        return out, None
    return out, x_mask[:, :, :-2:2][:, :, :-2:2]


# ---------------------------------------------------------------------------
# pure-JAX f32 reference (mirrors the PyTorch module, eval mode)
# ---------------------------------------------------------------------------

def _reference_forward(x, x_mask, params):
    h1 = _conv1_relu_nhwc(x, params["w1"], params["b1"])           # (B,T1,F1,C)
    w2 = jnp.transpose(params["w2"], (2, 3, 1, 0))                 # HWIO
    h2 = lax.conv_general_dilated(h1, w2, (2, 2), "VALID",
                                  dimension_numbers=("NHWC", "HWIO", "NHWC"))
    h2 = jnp.maximum(h2 + params["b2"][None, None, None, :], 0.0)  # (B,T2,F2,C)
    b, t2, f2, c = h2.shape
    feat = jnp.transpose(h2, (0, 1, 3, 2)).reshape(b, t2, c * f2)  # (chan, freq)
    odim = params["b_out"].shape[0]
    y = feat @ params["w_out"].T + params["b_out"]
    y = y * math.sqrt(float(odim)) + positional_encoding(t2, odim)[None]
    if x_mask is None:
        return y, None
    return y, x_mask[:, :, :-2:2][:, :, :-2:2]


# ---------------------------------------------------------------------------
# parameters
# ---------------------------------------------------------------------------

def init_params(idim, odim, key):
    ks = jax.random.split(key, 6)
    f2 = ((idim - 1) // 2 - 1) // 2

    def u(k, shape, fan_in):
        bound = 1.0 / math.sqrt(fan_in)
        return jax.random.uniform(k, shape, jnp.float32, -bound, bound)

    return {
        "w1": u(ks[0], (odim, 1, 3, 3), 1 * 9),
        "b1": u(ks[1], (odim,), 1 * 9),
        "w2": u(ks[2], (odim, odim, 3, 3), odim * 9),
        "b2": u(ks[3], (odim,), odim * 9),
        "w_out": u(ks[4], (odim, odim * f2), odim * f2),
        "b_out": u(ks[5], (odim,), odim * f2),
    }


if __name__ == "__main__":
    B, T, idim, odim = 2, 32, 16, 32
    key = jax.random.PRNGKey(0)
    kx, kp = jax.random.split(key)
    x = jax.random.normal(kx, (B, T, idim), dtype=jnp.float32)
    x_mask = jnp.ones((B, 1, T), dtype=bool)
    params = init_params(idim, odim, kp)

    fwd = jax.jit(conv2d_subsampling)
    out, mask = fwd(x, x_mask, params)
    out = jax.block_until_ready(out)
    mask = jax.block_until_ready(mask)

    t_out = ((T - 1) // 2 - 1) // 2
    assert out.shape == (B, t_out, odim), out.shape
    assert mask.shape == (B, 1, t_out), mask.shape
    assert bool(jnp.all(jnp.isfinite(out)))

    ref_out, ref_mask = _reference_forward(x, x_mask, params)
    max_err = float(jnp.max(jnp.abs(out - ref_out)))
    assert max_err < 5e-2, f"max abs err vs f32 reference: {max_err}"
    assert bool(jnp.array_equal(mask, ref_mask))
    print("KERNEL_OK")
</pallas_src>

<mosaic_0001>
module attributes {stable_mosaic.version = 11 : i64} {
  func.func @_fused_subsample_kernel(%arg0: i32, %arg1: i32, %arg2: memref<1x8x448xbf16, #tpu.memory_space<vmem>>, %arg3: memref<1x1x1x224xbf16, #tpu.memory_space<vmem>>, %arg4: memref<3x96x32xbf16, #tpu.memory_space<vmem>>, %arg5: memref<1x96xf32, #tpu.memory_space<vmem>>, %arg6: memref<96x32xbf16, #tpu.memory_space<vmem>>, %arg7: memref<1x32xf32, #tpu.memory_space<vmem>>, %arg8: memref<8x32xf32, #tpu.memory_space<vmem>>, %arg9: memref<1x8x32xf32, #tpu.memory_space<vmem>>, %arg10: memref<8x96xf32, #tpu.memory_space<vmem>>) attributes {dimension_semantics = [#tpu.dimension_semantics<parallel>, #tpu.dimension_semantics<parallel>], iteration_bounds = array<i64: 2, 1>, scalar_prefetch = 0 : i64, scratch_operands = 1 : i64, tpu.core_type = #tpu.core_type<tc>, window_params = [{transform_indices = @transform_0, window_bounds = array<i64: 1, 8, 448>}, {transform_indices = @transform_1, window_bounds = array<i64: 1, 1, 1, 224>}, {pipeline_mode = #tpu.pipeline_mode<synchronous>, transform_indices = @transform_2, window_bounds = array<i64: 3, 96, 32>}, {pipeline_mode = #tpu.pipeline_mode<synchronous>, transform_indices = @transform_3, window_bounds = array<i64: 1, 96>}, {pipeline_mode = #tpu.pipeline_mode<synchronous>, transform_indices = @transform_4, window_bounds = array<i64: 96, 32>}, {pipeline_mode = #tpu.pipeline_mode<synchronous>, transform_indices = @transform_5, window_bounds = array<i64: 1, 32>}, {transform_indices = @transform_6, window_bounds = array<i64: 8, 32>}, {transform_indices = @transform_7, window_bounds = array<i64: 1, 8, 32>}]} {
    %c0 = arith.constant 0 : index
    %c0_0 = arith.constant 0 : index
    %c0_1 = arith.constant 0 : index
    %0 = vector.load %arg4[%c0, %c0_0, %c0_1] : memref<3x96x32xbf16, #tpu.memory_space<vmem>>, vector<1x96x32xbf16>
    %1 = vector.shape_cast %0 : vector<1x96x32xbf16> to vector<96x32xbf16>
    %c0_2 = arith.constant 0 : index
    %c0_3 = arith.constant 0 : index
    %c0_4 = arith.constant 0 : index
    %2 = vector.load %arg2[%c0_2, %c0_3, %c0_4] : memref<1x8x448xbf16, #tpu.memory_space<vmem>>, vector<1x8x96xbf16>
    %3 = vector.shape_cast %2 : vector<1x8x96xbf16> to vector<8x96xbf16>
    %cst = arith.constant dense<0.000000e+00> : vector<8x32xf32>
    %4 = tpu.matmul %3, %1, %cst {dimension_numbers = #tpu.dot_dimension_numbers<[1], [0], [0], [1], [0, 0, 1, 1], [], []>} : vector<8x96xbf16>, vector<96x32xbf16>, vector<8x32xf32> -> vector<8x32xf32>
    %c0_5 = arith.constant 0 : index
    %c0_6 = arith.constant 0 : index
    %5 = vector.load %arg10[%c0_5, %c0_6] : memref<8x96xf32, #tpu.memory_space<vmem>>, vector<8x32xf32>
    tpu.vector_store %arg10[%c0_5, %c0_6], %4 {strides = array<i32>} : memref<8x96xf32, #tpu.memory_space<vmem>>, vector<8x32xf32>,
    %c0_7 = arith.constant 0 : index
    %c0_8 = arith.constant 0 : index
    %c64 = arith.constant 64 : index
    %6 = vector.load %arg2[%c0_7, %c0_8, %c64] : memref<1x8x448xbf16, #tpu.memory_space<vmem>>, vector<1x8x96xbf16>
    %7 = vector.shape_cast %6 : vector<1x8x96xbf16> to vector<8x96xbf16>
    %cst_9 = arith.constant dense<0.000000e+00> : vector<8x32xf32>
    %8 = tpu.matmul %7, %1, %cst_9 {dimension_numbers = #tpu.dot_dimension_numbers<[1], [0], [0], [1], [0, 0, 1, 1], [], []>} : vector<8x96xbf16>, vector<96x32xbf16>, vector<8x32xf32> -> vector<8x32xf32>
    %c0_10 = arith.constant 0 : index
    %c32 = arith.constant 32 : index
    %9 = vector.load %arg10[%c0_10, %c32] : memref<8x96xf32, #tpu.memory_space<vmem>>, vector<8x32xf32>
    tpu.vector_store %arg10[%c0_10, %c32], %8 {strides = array<i32>} : memref<8x96xf32, #tpu.memory_space<vmem>>, vector<8x32xf32>,
    %c0_11 = arith.constant 0 : index
    %c0_12 = arith.constant 0 : index
    %c128 = arith.constant 128 : index
    %10 = vector.load %arg2[%c0_11, %c0_12, %c128] : memref<1x8x448xbf16, #tpu.memory_space<vmem>>, vector<1x8x96xbf16>
    %11 = vector.shape_cast %10 : vector<1x8x96xbf16> to vector<8x96xbf16>
    %cst_13 = arith.constant dense<0.000000e+00> : vector<8x32xf32>
    %12 = tpu.matmul %11, %1, %cst_13 {dimension_numbers = #tpu.dot_dimension_numbers<[1], [0], [0], [1], [0, 0, 1, 1], [], []>} : vector<8x96xbf16>, vector<96x32xbf16>, vector<8x32xf32> -> vector<8x32xf32>
    %c0_14 = arith.constant 0 : index
    %c64_15 = arith.constant 64 : index
    %13 = vector.load %arg10[%c0_14, %c64_15] : memref<8x96xf32, #tpu.memory_space<vmem>>, vector<8x32xf32>
    tpu.vector_store %arg10[%c0_14, %c64_15], %12 {strides = array<i32>} : memref<8x96xf32, #tpu.memory_space<vmem>>, vector<8x32xf32>,
    %c1 = arith.constant 1 : index
    %c0_16 = arith.constant 0 : index
    %c0_17 = arith.constant 0 : index
    %14 = vector.load %arg4[%c1, %c0_16, %c0_17] : memref<3x96x32xbf16, #tpu.memory_space<vmem>>, vector<1x96x32xbf16>
    %15 = vector.shape_cast %14 : vector<1x96x32xbf16> to vector<96x32xbf16>
    %c0_18 = arith.constant 0 : index
    %c0_19 = arith.constant 0 : index
    %16 = vector.load %arg10[%c0_18, %c0_19] : memref<8x96xf32, #tpu.memory_space<vmem>>, vector<8x32xf32>
    %c0_20 = arith.constant 0 : index
    %c0_21 = arith.constant 0 : index
    %c224 = arith.constant 224 : index
    %17 = vector.load %arg2[%c0_20, %c0_21, %c224] : memref<1x8x448xbf16, #tpu.memory_space<vmem>>, vector<1x8x96xbf16>
    %18 = vector.shape_cast %17 : vector<1x8x96xbf16> to vector<8x96xbf16>
    %cst_22 = arith.constant dense<0.000000e+00> : vector<8x32xf32>
    %19 = tpu.matmul %18, %15, %cst_22 {dimension_numbers = #tpu.dot_dimension_numbers<[1], [0], [0], [1], [0, 0, 1, 1], [], []>} : vector<8x96xbf16>, vector<96x32xbf16>, vector<8x32xf32> -> vector<8x32xf32>
    %20 = arith.addf %16, %19 : vector<8x32xf32>
    %c0_23 = arith.constant 0 : index
    %c0_24 = arith.constant 0 : index
    %21 = vector.load %arg10[%c0_23, %c0_24] : memref<8x96xf32, #tpu.memory_space<vmem>>, vector<8x32xf32>
    tpu.vector_store %arg10[%c0_23, %c0_24], %20 {strides = array<i32>} : memref<8x96xf32, #tpu.memory_space<vmem>>, vector<8x32xf32>,
    %c0_25 = arith.constant 0 : index
    %c32_26 = arith.constant 32 : index
    %22 = vector.load %arg10[%c0_25, %c32_26] : memref<8x96xf32, #tpu.memory_space<vmem>>, vector<8x32xf32>
    %c0_27 = arith.constant 0 : index
    %c0_28 = arith.constant 0 : index
    %c288 = arith.constant 288 : index
    %23 = vector.load %arg2[%c0_27, %c0_28, %c288] : memref<1x8x448xbf16, #tpu.memory_space<vmem>>, vector<1x8x96xbf16>
    %24 = vector.shape_cast %23 : vector<1x8x96xbf16> to vector<8x96xbf16>
    %cst_29 = arith.constant dense<0.000000e+00> : vector<8x32xf32>
    %25 = tpu.matmul %24, %15, %cst_29 {dimension_numbers = #tpu.dot_dimension_numbers<[1], [0], [0], [1], [0, 0, 1, 1], [], []>} : vector<8x96xbf16>, vector<96x32xbf16>, vector<8x32xf32> -> vector<8x32xf32>
    %26 = arith.addf %22, %25 : vector<8x32xf32>
    %c0_30 = arith.constant 0 : index
    %c32_31 = arith.constant 32 : index
    %27 = vector.load %arg10[%c0_30, %c32_31] : memref<8x96xf32, #tpu.memory_space<vmem>>, vector<8x32xf32>
    tpu.vector_store %arg10[%c0_30, %c32_31], %26 {strides = array<i32>} : memref<8x96xf32, #tpu.memory_space<vmem>>, vector<8x32xf32>,
    %c0_32 = arith.constant 0 : index
    %c64_33 = arith.constant 64 : index
    %28 = vector.load %arg10[%c0_32, %c64_33] : memref<8x96xf32, #tpu.memory_space<vmem>>, vector<8x32xf32>
    %c0_34 = arith.constant 0 : index
    %c0_35 = arith.constant 0 : index
    %c352 = arith.constant 352 : index
    %29 = vector.load %arg2[%c0_34, %c0_35, %c352] : memref<1x8x448xbf16, #tpu.memory_space<vmem>>, vector<1x8x96xbf16>
    %30 = vector.shape_cast %29 : vector<1x8x96xbf16> to vector<8x96xbf16>
    %cst_36 = arith.constant dense<0.000000e+00> : vector<8x32xf32>
    %31 = tpu.matmul %30, %15, %cst_36 {dimension_numbers = #tpu.dot_dimension_numbers<[1], [0], [0], [1], [0, 0, 1, 1], [], []>} : vector<8x96xbf16>, vector<96x32xbf16>, vector<8x32xf32> -> vector<8x32xf32>
    %32 = arith.addf %28, %31 : vector<8x32xf32>
    %c0_37 = arith.constant 0 : index
    %c64_38 = arith.constant 64 : index
    %33 = vector.load %arg10[%c0_37, %c64_38] : memref<8x96xf32, #tpu.memory_space<vmem>>, vector<8x32xf32>
    tpu.vector_store %arg10[%c0_37, %c64_38], %32 {strides = array<i32>} : memref<8x96xf32, #tpu.memory_space<vmem>>, vector<8x32xf32>,
    %c2 = arith.constant 2 : index
    %c0_39 = arith.constant 0 : index
    %c0_40 = arith.constant 0 : index
    %34 = vector.load %arg4[%c2, %c0_39, %c0_40] : memref<3x96x32xbf16, #tpu.memory_space<vmem>>, vector<1x96x32xbf16>
    %35 = vector.shape_cast %34 : vector<1x96x32xbf16> to vector<96x32xbf16>
    %c0_41 = arith.constant 0 : index
    %c0_42 = arith.constant 0 : index
    %c0_43 = arith.constant 0 : index
    %c0_44 = arith.constant 0 : index
    %36 = vector.load %arg3[%c0_41, %c0_42, %c0_43, %c0_44] : memref<1x1x1x224xbf16, #tpu.memory_space<vmem>>, vector<1x1x1x224xbf16>
    %37 = vector.shape_cast %36 : vector<1x1x1x224xbf16> to vector<1x224xbf16>
    %c0_45 = arith.constant 0 : index
    %c0_46 = arith.constant 0 : index
    %c0_47 = arith.constant 0 : index
    %38 = vector.load %arg2[%c0_45, %c0_46, %c0_47] : memref<1x8x448xbf16, #tpu.memory_space<vmem>>, vector<1x8x96xbf16>
    %39 = vector.shape_cast %38 : vector<1x8x96xbf16> to vector<8x96xbf16>
    %cst_48 = arith.constant dense<0.000000e+00> : vector<8x32xf32>
    %40 = tpu.matmul %39, %35, %cst_48 {dimension_numbers = #tpu.dot_dimension_numbers<[1], [0], [0], [1], [0, 0, 1, 1], [], []>} : vector<8x96xbf16>, vector<96x32xbf16>, vector<8x32xf32> -> vector<8x32xf32>
    %41 = vector.extract_strided_slice %37 {offsets = [0, 0], sizes = [1, 96], strides = [1, 1]} : vector<1x224xbf16> to vector<1x96xbf16>
    %cst_49 = arith.constant dense<0.000000e+00> : vector<1x32xf32>
    %42 = tpu.matmul %41, %35, %cst_49 {dimension_numbers = #tpu.dot_dimension_numbers<[1], [0], [0], [1], [0, 0, 1, 1], [], []>} : vector<1x96xbf16>, vector<96x32xbf16>, vector<1x32xf32> -> vector<1x32xf32>
    %c0_50 = arith.constant 0 : index
    %c0_51 = arith.constant 0 : index
    %43 = vector.load %arg10[%c0_50, %c0_51] : memref<8x96xf32, #tpu.memory_space<vmem>>, vector<8x32xf32>
    %44 = vector.extract_strided_slice %40 {offsets = [1, 0], sizes = [7, 32], strides = [1, 1]} : vector<8x32xf32> to vector<7x32xf32>
    %45 = tpu.concatenate %44, %42 in 0 : vector<7x32xf32>, vector<1x32xf32> -> vector<8x32xf32>
    %46 = arith.addf %43, %45 : vector<8x32xf32>
    %c0_52 = arith.constant 0 : index
    %c0_53 = arith.constant 0 : index
    %47 = vector.load %arg10[%c0_52, %c0_53] : memref<8x96xf32, #tpu.memory_space<vmem>>, vector<8x32xf32>
    tpu.vector_store %arg10[%c0_52, %c0_53], %46 {strides = array<i32>} : memref<8x96xf32, #tpu.memory_space<vmem>>, vector<8x32xf32>,
    %c0_54 = arith.constant 0 : index
    %c0_55 = arith.constant 0 : index
    %c64_56 = arith.constant 64 : index
    %48 = vector.load %arg2[%c0_54, %c0_55, %c64_56] : memref<1x8x448xbf16, #tpu.memory_space<vmem>>, vector<1x8x96xbf16>
    %49 = vector.shape_cast %48 : vector<1x8x96xbf16> to vector<8x96xbf16>
    %cst_57 = arith.constant dense<0.000000e+00> : vector<8x32xf32>
    %50 = tpu.matmul %49, %35, %cst_57 {dimension_numbers = #tpu.dot_dimension_numbers<[1], [0], [0], [1], [0, 0, 1, 1], [], []>} : vector<8x96xbf16>, vector<96x32xbf16>, vector<8x32xf32> -> vector<8x32xf32>
    %51 = vector.extract_strided_slice %37 {offsets = [0, 64], sizes = [1, 96], strides = [1, 1]} : vector<1x224xbf16> to vector<1x96xbf16>
    %cst_58 = arith.constant dense<0.000000e+00> : vector<1x32xf32>
    %52 = tpu.matmul %51, %35, %cst_58 {dimension_numbers = #tpu.dot_dimension_numbers<[1], [0], [0], [1], [0, 0, 1, 1], [], []>} : vector<1x96xbf16>, vector<96x32xbf16>, vector<1x32xf32> -> vector<1x32xf32>
    %c0_59 = arith.constant 0 : index
    %c32_60 = arith.constant 32 : index
    %53 = vector.load %arg10[%c0_59, %c32_60] : memref<8x96xf32, #tpu.memory_space<vmem>>, vector<8x32xf32>
    %54 = vector.extract_strided_slice %50 {offsets = [1, 0], sizes = [7, 32], strides = [1, 1]} : vector<8x32xf32> to vector<7x32xf32>
    %55 = tpu.concatenate %54, %52 in 0 : vector<7x32xf32>, vector<1x32xf32> -> vector<8x32xf32>
    %56 = arith.addf %53, %55 : vector<8x32xf32>
    %c0_61 = arith.constant 0 : index
    %c32_62 = arith.constant 32 : index
    %57 = vector.load %arg10[%c0_61, %c32_62] : memref<8x96xf32, #tpu.memory_space<vmem>>, vector<8x32xf32>
    tpu.vector_store %arg10[%c0_61, %c32_62], %56 {strides = array<i32>} : memref<8x96xf32, #tpu.memory_space<vmem>>, vector<8x32xf32>,
    %c0_63 = arith.constant 0 : index
    %c0_64 = arith.constant 0 : index
    %c128_65 = arith.constant 128 : index
    %58 = vector.load %arg2[%c0_63, %c0_64, %c128_65] : memref<1x8x448xbf16, #tpu.memory_space<vmem>>, vector<1x8x96xbf16>
    %59 = vector.shape_cast %58 : vector<1x8x96xbf16> to vector<8x96xbf16>
    %cst_66 = arith.constant dense<0.000000e+00> : vector<8x32xf32>
    %60 = tpu.matmul %59, %35, %cst_66 {dimension_numbers = #tpu.dot_dimension_numbers<[1], [0], [0], [1], [0, 0, 1, 1], [], []>} : vector<8x96xbf16>, vector<96x32xbf16>, vector<8x32xf32> -> vector<8x32xf32>
    %61 = vector.extract_strided_slice %37 {offsets = [0, 128], sizes = [1, 96], strides = [1, 1]} : vector<1x224xbf16> to vector<1x96xbf16>
    %cst_67 = arith.constant dense<0.000000e+00> : vector<1x32xf32>
    %62 = tpu.matmul %61, %35, %cst_67 {dimension_numbers = #tpu.dot_dimension_numbers<[1], [0], [0], [1], [0, 0, 1, 1], [], []>} : vector<1x96xbf16>, vector<96x32xbf16>, vector<1x32xf32> -> vector<1x32xf32>
    %c0_68 = arith.constant 0 : index
    %c64_69 = arith.constant 64 : index
    %63 = vector.load %arg10[%c0_68, %c64_69] : memref<8x96xf32, #tpu.memory_space<vmem>>, vector<8x32xf32>
    %64 = vector.extract_strided_slice %60 {offsets = [1, 0], sizes = [7, 32], strides = [1, 1]} : vector<8x32xf32> to vector<7x32xf32>
    %65 = tpu.concatenate %64, %62 in 0 : vector<7x32xf32>, vector<1x32xf32> -> vector<8x32xf32>
    %66 = arith.addf %63, %65 : vector<8x32xf32>
    %c0_70 = arith.constant 0 : index
    %c64_71 = arith.constant 64 : index
    %67 = vector.load %arg10[%c0_70, %c64_71] : memref<8x96xf32, #tpu.memory_space<vmem>>, vector<8x32xf32>
    tpu.vector_store %arg10[%c0_70, %c64_71], %66 {strides = array<i32>} : memref<8x96xf32, #tpu.memory_space<vmem>>, vector<8x32xf32>,
    %c0_72 = arith.constant 0 : index
    %c0_73 = arith.constant 0 : index
    %68 = vector.load %arg10[%c0_72, %c0_73] : memref<8x96xf32, #tpu.memory_space<vmem>>, vector<8x96xf32>
    %c0_74 = arith.constant 0 : index
    %c0_75 = arith.constant 0 : index
    %69 = vector.load %arg5[%c0_74, %c0_75] : memref<1x96xf32, #tpu.memory_space<vmem>>, vector<1x96xf32>
    %70 = vector.broadcast %69 : vector<1x96xf32> to vector<8x96xf32>
    %71 = arith.addf %68, %70 : vector<8x96xf32>
    %cst_76 = arith.constant 0.000000e+00 : f32
    %72 = vector.broadcast %cst_76 : f32 to vector<8x96xf32>
    %73 = arith.maximumf %71, %72 : vector<8x96xf32>
    %74 = arith.truncf %73 : vector<8x96xf32> to vector<8x96xbf16>
    %c0_77 = arith.constant 0 : index
    %c0_78 = arith.constant 0 : index
    %75 = vector.load %arg6[%c0_77, %c0_78] : memref<96x32xbf16, #tpu.memory_space<vmem>>, vector<96x32xbf16>
    %cst_79 = arith.constant dense<0.000000e+00> : vector<8x32xf32>
    %76 = tpu.matmul %74, %75, %cst_79 {dimension_numbers = #tpu.dot_dimension_numbers<[1], [0], [0], [1], [0, 0, 1, 1], [], []>} : vector<8x96xbf16>, vector<96x32xbf16>, vector<8x32xf32> -> vector<8x32xf32>
    %c0_80 = arith.constant 0 : index
    %c0_81 = arith.constant 0 : index
    %77 = vector.load %arg7[%c0_80, %c0_81] : memref<1x32xf32, #tpu.memory_space<vmem>>, vector<1x32xf32>
    %78 = vector.broadcast %77 : vector<1x32xf32> to vector<8x32xf32>
    %79 = arith.addf %76, %78 : vector<8x32xf32>
    %cst_82 = arith.constant 5.65685415 : f32
    %80 = vector.broadcast %cst_82 : f32 to vector<8x32xf32>
    %81 = arith.mulf %79, %80 : vector<8x32xf32>
    %c0_83 = arith.constant 0 : index
    %c0_84 = arith.constant 0 : index
    %82 = vector.load %arg8[%c0_83, %c0_84] : memref<8x32xf32, #tpu.memory_space<vmem>>, vector<8x32xf32>
    %83 = arith.addf %81, %82 : vector<8x32xf32>
    %c0_85 = arith.constant 0 : index
    %c0_86 = arith.constant 0 : index
    %c0_87 = arith.constant 0 : index
    %84 = vector.load %arg9[%c0_85, %c0_86, %c0_87] : memref<1x8x32xf32, #tpu.memory_space<vmem>>, vector<1x8x32xf32>
    %85 = vector.shape_cast %84 : vector<1x8x32xf32> to vector<8x32xf32>
    %86 = vector.shape_cast %83 : vector<8x32xf32> to vector<1x8x32xf32>
    tpu.vector_store %arg9[%c0_85, %c0_86, %c0_87], %86 {strides = array<i32>} : memref<1x8x32xf32, #tpu.memory_space<vmem>>, vector<1x8x32xf32>,
    return
  }
  func.func @transform_0(%arg0: i32, %arg1: i32) -> (i32, i32, i32) {
    %c0_i32 = arith.constant 0 : i32
    %c0_i32_0 = arith.constant 0 : i32
    return %arg0, %arg1, %c0_i32 : i32, i32, i32
  }
  func.func @transform_1(%arg0: i32, %arg1: i32) -> (i32, i32, i32, i32) {
    %c0_i32 = arith.constant 0 : i32
    %c0_i32_0 = arith.constant 0 : i32
    %c0_i32_1 = arith.constant 0 : i32
    return %arg0, %arg1, %c0_i32, %c0_i32_0 : i32, i32, i32, i32
  }
  func.func @transform_2(%arg0: i32, %arg1: i32) -> (i32, i32, i32) {
    %c0_i32 = arith.constant 0 : i32
    %c0_i32_0 = arith.constant 0 : i32
    %c0_i32_1 = arith.constant 0 : i32
    %c0_i32_2 = arith.constant 0 : i32
    return %c0_i32, %c0_i32_0, %c0_i32_1 : i32, i32, i32
  }
  func.func @transform_3(%arg0: i32, %arg1: i32) -> (i32, i32) {
    %c0_i32 = arith.constant 0 : i32
    %c0_i32_0 = arith.constant 0 : i32
    %c0_i32_1 = arith.constant 0 : i32
    return %c0_i32, %c0_i32_0 : i32, i32
  }
  func.func @transform_4(%arg0: i32, %arg1: i32) -> (i32, i32) {
    %c0_i32 = arith.constant 0 : i32
    %c0_i32_0 = arith.constant 0 : i32
    %c0_i32_1 = arith.constant 0 : i32
    return %c0_i32, %c0_i32_0 : i32, i32
  }
  func.func @transform_5(%arg0: i32, %arg1: i32) -> (i32, i32) {
    %c0_i32 = arith.constant 0 : i32
    %c0_i32_0 = arith.constant 0 : i32
    %c0_i32_1 = arith.constant 0 : i32
    return %c0_i32, %c0_i32_0 : i32, i32
  }
  func.func @transform_6(%arg0: i32, %arg1: i32) -> (i32, i32) {
    %c0_i32 = arith.constant 0 : i32
    %c0_i32_0 = arith.constant 0 : i32
    return %arg1, %c0_i32 : i32, i32
  }
  func.func @transform_7(%arg0: i32, %arg1: i32) -> (i32, i32, i32) {
    %c0_i32 = arith.constant 0 : i32
    %c0_i32_0 = arith.constant 0 : i32
    return %arg0, %arg1, %c0_i32 : i32, i32, i32
  }
}

</mosaic_0001>

<llo_original>
// kernel: tile.8
$region0: #{tile.8}
  #allocation0 [shape = 's32[1]{0}', space=sflag, size = 0x4, scoped, tag = 'scoped memory for tile.8']
  %s0 = inlined_call_operand.vmem [shape: f32[32], index: 0, kind: input, shape index: {}]
  %s1 = inlined_call_operand.vmem [shape: f32[3,32], index: 1, kind: output, shape index: {}]
  // Predicated region
  $region2: #{tile.8} parent=0 // pred_check
    _
  $region3: #{tile.8} parent=0 // pred_check_branch
    %3 = sbr.rel (0) target = $region5
  $region4: #{tile.8} parent=0 // pred_region
    _
  $region5: #{tile.8} parent=0 // pred_fallthru
    _
  %v4 = vld [vmem:[%s0] ss:$0 sm:$0xff]
  %5 = vst [vmem:[%s1] sm:$0xf] %v4

// kernel: tile.9
$region0: #{tile.9}
  %s0 = inlined_call_operand.vmem [shape: f32[3,32], index: 0, kind: input, shape index: {}]
  %s1 = inlined_call_operand.vmem [shape: f32[1,96], index: 1, kind: output, shape index: {}]
  $region1: #{tile.9} parent=0
    #allocation0 [shape = 'u8[4096]{0}', space=vmem, size = 0x1000, scoped, tag = 'scoped mem for output reshape']
    #allocation1 [shape = 'u8[4096]{0}', space=vmem, size = 0x1000, scoped, tag = 'scoped mem for input reshape']
    %s3 = sshll.u32 1, 4
    %s4 = ssub.s32 %s3, 1
    %v5 = vld [vmem:[%s0] sm:%s4]
    %6 = vst [vmem:[#allocation1] sm:%s4] %v5
    %v7 = vld [vmem:[#allocation1] sm:$0x1]
    %vm8 = vcmask 261120
    %9 = vst.msk [vmem:[#allocation0] sm:$0x1] %vm8, %v7
    %s10 = scalar_lea.vmem [#allocation1], 2
    %v11 = vld [vmem:[%s10] sm:$0x1]
    %12 = vrot.lane.b32.xlu0 %v11, 64
    %v13 = vpop.permute.xlu0 %12
    %vm14 = vcmask 785920
    %15 = vst.msk [vmem:[#allocation0] sm:$0x1] %vm14, %v13
    %s16 = scalar_lea.vmem [#allocation1], 1
    %v17 = vld [vmem:[%s16] sm:$0x1]
    %18 = vrot.lane.b32.xlu0 %v17, 32
    %v19 = vpop.permute.xlu0 %18
    %vm20 = vcmask 523520
    %21 = vst.msk [vmem:[#allocation0] sm:$0x1] %vm20, %v19
    %s23 = sshll.u32 1, 1
    %s24 = ssub.s32 %s23, 1
    %v26 = vld [vmem:[#allocation0] sm:%s24]
    %s27 = sshll.u32 1, 1
    %s28 = ssub.s32 %s27, 1
    %29 = vst [vmem:[%s1] sm:%s28] %v26

// kernel: conv2d_subsampling.1
$region0: #{conv2d_subsampling.1}
  #allocation0 [shape = 'u32[]', space=smem, size = 0x4, offset = 0x4, fixed_abs, tag = 'smem constant byte address 0x4 - core index']
  #allocation1 [shape = 'u32[144,128]{1,0:T(1,128)}', space=vmem, size = 0x12000, scoped, tag = 'internal scratch']
  #allocation2 [shape = 'f32[8,96]{1,0:T(8,128)}', space=vmem, size = 0x1000, scoped, tag = 'scratch operand']
  %s0 = inlined_call_operand.vmem [shape: bf16[2,8,448], index: 0, kind: input, shape index: {}]
  %s1 = inlined_call_operand.vmem [shape: bf16[2,1,1,224], index: 1, kind: input, shape index: {}]
  %s2 = inlined_call_operand.vmem [shape: bf16[3,96,32], index: 2, kind: input, shape index: {}]
  %s3 = inlined_call_operand.vmem [shape: f32[1,96], index: 3, kind: input, shape index: {}]
  %s4 = inlined_call_operand.vmem [shape: bf16[96,32], index: 4, kind: input, shape index: {}]
  %s5 = inlined_call_operand.vmem [shape: f32[1,32], index: 5, kind: input, shape index: {}]
  %s6 = inlined_call_operand.vmem [shape: f32[8,32], index: 6, kind: input, shape index: {}]
  %s7 = inlined_call_operand.vmem [shape: f32[2,8,32], index: 7, kind: output, shape index: {}]
  %s8 = sld [smem:[#allocation0]]
  $region61: #{conv2d_subsampling.1} parent=0
    _
  %s10 = ssub.s32 1, %s8
  %s11 = scalar_select 0, %s10, %s8
  loop: start=0, step=1, limit=4
  $region2: #{conv2d_subsampling.1} parent=0 // loop_pre_header
    _
  $region3: #{conv2d_subsampling.1} parent=0 // loop_header
    %s13 = sphi 0, %s17
    %p14 = scmp.ge.s32.totalorder %s13, 4
    %s20 = sphi 0, %s32
    %s21 = sphi 0, %s28
    %s22 = sphi 0, %s20
    %s23 = sphi 0, %s21
    %s24 = sphi 0, %s22
    %s25 = sphi 0, %s23
    %s37 = sphi 0, %s39
    %s40 = sphi 0, %s37
    %s41 = sphi 0, %s40
    %s57 = sphi 0, %s41
    %s65 = sphi 0, %s67
    %s68 = sphi 0, %s65
    %s69 = sphi 0, %s68
    %s85 = sphi 0, %s69
    %s89 = sphi 0, %s89
    %s91 = sphi 0, %s89
    %s92 = sphi 0, %s91
    %s106 = sphi 0, %s92
    %s110 = sphi 0, %s110
    %s112 = sphi 0, %s110
    %s113 = sphi 0, %s112
    %s127 = sphi 0, %s113
    %s131 = sphi 0, %s131
    %s133 = sphi 0, %s131
    %s134 = sphi 0, %s133
    %s148 = sphi 0, %s134
    %s152 = sphi 0, %s152
    %s154 = sphi 0, %s152
    %s155 = sphi 0, %s154
    %s169 = sphi 0, %s155
    %s175 = sphi 0, %s177
    %s178 = sphi 0, %s175
    %s179 = sphi 0, %s178
    %s195 = sphi 0, %s179
    %s203 = sphi 0, %s205
    %s206 = sphi 0, %s203
    %s207 = sphi 0, %s206
    %s223 = sphi 0, %s207
  $region4: #{conv2d_subsampling.1} parent=0 // loop_header_branch
    %16 = sbr.rel (%p14) target = $region8
  $region5: #{conv2d_subsampling.1} parent=0 // loop_body
    %s18 = ssub.s32 %s13, 1
    %s19 = ssub.s32 %s13, 2
    %s26 = sadd.s32 1, %s21
    %p27 = scmp.ge.s32.totalorder %s26, 1
    %s28 = scalar_select %p27, 0, %s26
    %s29 = sadd.s32 1, %s20
    %s30 = scalar_select %p27, %s29, %s20
    %p31 = scmp.ge.s32.totalorder %s30, 2
    %s32 = scalar_select %p31, 0, %s30
    %s33 = ssub.s32 %s20, %s32
    %s34 = ssub.s32 %s21, %s28
    %s35 = sor.u32 %s33, %s34
    %p36 = scmp.eq.s32.totalorder %s35, 0
    %s38 = sadd.s32 %s37, 1
    %s39 = scalar_select %p36, %s37, %s38
    %p42 = pneg %p36
    %p43 = scmp.eq.s32.totalorder %s13, 1
    %p44 = por %p42, %p43
    %p45 = scmp.ne.s32.totalorder %s37, %s40
    %p46 = scmp.eq.s32.totalorder %s13, 0
    %p47 = por %p45, %p46
    %p48 = scmp.ne.s32.totalorder %s37, %s40
    %p49 = scmp.eq.s32.totalorder %s18, 1
    %p50 = por %p48, %p49
    %p51 = scmp.ne.s32.totalorder %s40, %s41
    %p52 = scmp.eq.s32.totalorder %s18, 0
    %p53 = por %p51, %p52
    %p54 = scmp.ne.s32.totalorder %s40, %s41
    %p55 = scmp.eq.s32.totalorder %s19, 1
    %p56 = por %p54, %p55
    %p58 = scmp.ne.s32.totalorder %s41, %s57
    %p59 = scmp.eq.s32.totalorder %s19, 0
    %p60 = por %p58, %p59
    %s61 = ssub.s32 %s20, %s32
    %s62 = ssub.s32 %s21, %s28
    %s63 = sor.u32 %s61, %s62
    %p64 = scmp.eq.s32.totalorder %s63, 0
    %s66 = sadd.s32 %s65, 1
    %s67 = scalar_select %p64, %s65, %s66
    %p70 = pneg %p64
    %p71 = scmp.eq.s32.totalorder %s13, 1
    %p72 = por %p70, %p71
    %p73 = scmp.ne.s32.totalorder %s65, %s68
    %p74 = scmp.eq.s32.totalorder %s13, 0
    %p75 = por %p73, %p74
    %p76 = scmp.ne.s32.totalorder %s65, %s68
    %p77 = scmp.eq.s32.totalorder %s18, 1
    %p78 = por %p76, %p77
    %p79 = scmp.ne.s32.totalorder %s68, %s69
    %p80 = scmp.eq.s32.totalorder %s18, 0
    %p81 = por %p79, %p80
    %p82 = scmp.ne.s32.totalorder %s68, %s69
    %p83 = scmp.eq.s32.totalorder %s19, 1
    %p84 = por %p82, %p83
    %p86 = scmp.ne.s32.totalorder %s69, %s85
    %p87 = scmp.eq.s32.totalorder %s19, 0
    %p88 = por %p86, %p87
    %s90 = sadd.s32 %s89, 1
    %p93 = scmp.eq.s32.totalorder %s13, 1
    %p94 = scmp.ne.s32.totalorder %s89, %s91
    %p95 = scmp.eq.s32.totalorder %s13, 0
    %p96 = por %p94, %p95
    %p97 = scmp.ne.s32.totalorder %s89, %s91
    %p98 = scmp.eq.s32.totalorder %s18, 1
    %p99 = por %p97, %p98
    %p100 = scmp.ne.s32.totalorder %s91, %s92
    %p101 = scmp.eq.s32.totalorder %s18, 0
    %p102 = por %p100, %p101
    %p103 = scmp.ne.s32.totalorder %s91, %s92
    %p104 = scmp.eq.s32.totalorder %s19, 1
    %p105 = por %p103, %p104
    %p107 = scmp.ne.s32.totalorder %s92, %s106
    %p108 = scmp.eq.s32.totalorder %s19, 0
    %p109 = por %p107, %p108
    %s111 = sadd.s32 %s110, 1
    %p114 = scmp.eq.s32.totalorder %s13, 1
    %p115 = scmp.ne.s32.totalorder %s110, %s112
    %p116 = scmp.eq.s32.totalorder %s13, 0
    %p117 = por %p115, %p116
    %p118 = scmp.ne.s32.totalorder %s110, %s112
    %p119 = scmp.eq.s32.totalorder %s18, 1
    %p120 = por %p118, %p119
    %p121 = scmp.ne.s32.totalorder %s112, %s113
    %p122 = scmp.eq.s32.totalorder %s18, 0
    %p123 = por %p121, %p122
    %p124 = scmp.ne.s32.totalorder %s112, %s113
    %p125 = scmp.eq.s32.totalorder %s19, 1
    %p126 = por %p124, %p125
    %p128 = scmp.ne.s32.totalorder %s113, %s127
    %p129 = scmp.eq.s32.totalorder %s19, 0
    %p130 = por %p128, %p129
    %s132 = sadd.s32 %s131, 1
    %p135 = scmp.eq.s32.totalorder %s13, 1
    %p136 = scmp.ne.s32.totalorder %s131, %s133
    %p137 = scmp.eq.s32.totalorder %s13, 0
    %p138 = por %p136, %p137
    %p139 = scmp.ne.s32.totalorder %s131, %s133
    %p140 = scmp.eq.s32.totalorder %s18, 1
    %p141 = por %p139, %p140
    %p142 = scmp.ne.s32.totalorder %s133, %s134
    %p143 = scmp.eq.s32.totalorder %s18, 0
    %p144 = por %p142, %p143
    %p145 = scmp.ne.s32.totalorder %s133, %s134
    %p146 = scmp.eq.s32.totalorder %s19, 1
    %p147 = por %p145, %p146
    %p149 = scmp.ne.s32.totalorder %s134, %s148
    %p150 = scmp.eq.s32.totalorder %s19, 0
    %p151 = por %p149, %p150
    %s153 = sadd.s32 %s152, 1
    %p156 = scmp.eq.s32.totalorder %s13, 1
    %p157 = scmp.ne.s32.totalorder %s152, %s154
    %p158 = scmp.eq.s32.totalorder %s13, 0
    %p159 = por %p157, %p158
    %p160 = scmp.ne.s32.totalorder %s152, %s154
    %p161 = scmp.eq.s32.totalorder %s18, 1
    %p162 = por %p160, %p161
    %p163 = scmp.ne.s32.totalorder %s154, %s155
    %p164 = scmp.eq.s32.totalorder %s18, 0
    %p165 = por %p163, %p164
    %p166 = scmp.ne.s32.totalorder %s154, %s155
    %p167 = scmp.eq.s32.totalorder %s19, 1
    %p168 = por %p166, %p167
    %p170 = scmp.ne.s32.totalorder %s155, %s169
    %p171 = scmp.eq.s32.totalorder %s19, 0
    %p172 = por %p170, %p171
    %s173 = ssub.s32 %s21, %s28
    %p174 = scmp.eq.s32.totalorder %s173, 0
    %s176 = sadd.s32 %s175, 1
    %s177 = scalar_select %p174, %s175, %s176
    %p180 = pneg %p174
    %p181 = scmp.eq.s32.totalorder %s13, 1
    %p182 = por %p180, %p181
    %p183 = scmp.ne.s32.totalorder %s175, %s178
    %p184 = scmp.eq.s32.totalorder %s13, 0
    %p185 = por %p183, %p184
    %p186 = scmp.ne.s32.totalorder %s175, %s178
    %p187 = scmp.eq.s32.totalorder %s18, 1
    %p188 = por %p186, %p187
    %p189 = scmp.ne.s32.totalorder %s178, %s179
    %p190 = scmp.eq.s32.totalorder %s18, 0
    %p191 = por %p189, %p190
    %p192 = scmp.ne.s32.totalorder %s178, %s179
    %p193 = scmp.eq.s32.totalorder %s19, 1
    %p194 = por %p192, %p193
    %p196 = scmp.ne.s32.totalorder %s179, %s195
    %p197 = scmp.eq.s32.totalorder %s19, 0
    %p198 = por %p196, %p197
    %s199 = ssub.s32 %s20, %s32
    %s200 = ssub.s32 %s21, %s28
    %s201 = sor.u32 %s199, %s200
    %p202 = scmp.eq.s32.totalorder %s201, 0
    %s204 = sadd.s32 %s203, 1
    %s205 = scalar_select %p202, %s203, %s204
    %p208 = pneg %p202
    %p209 = scmp.eq.s32.totalorder %s13, 1
    %p210 = por %p208, %p209
    %p211 = scmp.ne.s32.totalorder %s203, %s206
    %p212 = scmp.eq.s32.totalorder %s13, 0
    %p213 = por %p211, %p212
    %p214 = scmp.ne.s32.totalorder %s203, %s206
    %p215 = scmp.eq.s32.totalorder %s18, 1
    %p216 = por %p214, %p215
    %p217 = scmp.ne.s32.totalorder %s206, %s207
    %p218 = scmp.eq.s32.totalorder %s18, 0
    %p219 = por %p217, %p218
    %p220 = scmp.ne.s32.totalorder %s206, %s207
    %p221 = scmp.eq.s32.totalorder %s19, 1
    %p222 = por %p220, %p221
    %p224 = scmp.ne.s32.totalorder %s207, %s223
    %p225 = scmp.eq.s32.totalorder %s19, 0
    %p226 = por %p224, %p225
    %p227 = scmp.le.s32.totalorder 1, %s13
    %p228 = scmp.lt.s32.totalorder %s13, 3
    %p229 = pnand %p227, %p228
    %p230 = pneg %p229
    // Predicated region
    $region9: #{conv2d_subsampling.1} parent=5 // pred_check
      _
    $region10: #{conv2d_subsampling.1} parent=5 // pred_check_branch
      %232 = sbr.rel (%p229) target = $region12
    $region11: #{conv2d_subsampling.1} parent=5 // pred_region
      %s233 = ssub.s32 %s13, 1
      // Predicated region
      $region13: #{conv2d_subsampling.1} parent=11 // pred_check
        %p234 = pneg %p102
      $region14: #{conv2d_subsampling.1} parent=11 // pred_check_branch
        %236 = sbr.rel (%p234) target = $region16
      $region15: #{conv2d_subsampling.1} parent=11 // pred_region
        _
      $region16: #{conv2d_subsampling.1} parent=11 // pred_fallthru
        _
      // Predicated region
      $region17: #{conv2d_subsampling.1} parent=11 // pred_check
        %p237 = pneg %p123
      $region18: #{conv2d_subsampling.1} parent=11 // pred_check_branch
        %239 = sbr.rel (%p237) target = $region20
      $region19: #{conv2d_subsampling.1} parent=11 // pred_region
        _
      $region20: #{conv2d_subsampling.1} parent=11 // pred_fallthru
        _
      // Predicated region
      $region21: #{conv2d_subsampling.1} parent=11 // pred_check
        %p240 = pneg %p144
      $region22: #{conv2d_subsampling.1} parent=11 // pred_check_branch
        %242 = sbr.rel (%p240) target = $region24
      $region23: #{conv2d_subsampling.1} parent=11 // pred_region
        _
      $region24: #{conv2d_subsampling.1} parent=11 // pred_fallthru
        _
      // Predicated region
      $region25: #{conv2d_subsampling.1} parent=11 // pred_check
        %p243 = pneg %p165
      $region26: #{conv2d_subsampling.1} parent=11 // pred_check_branch
        %245 = sbr.rel (%p243) target = $region28
      $region27: #{conv2d_subsampling.1} parent=11 // pred_region
        _
      $region28: #{conv2d_subsampling.1} parent=11 // pred_fallthru
        _
      // Predicated region
      $region29: #{conv2d_subsampling.1} parent=11 // pred_check
        %p246 = pneg %p191
      $region30: #{conv2d_subsampling.1} parent=11 // pred_check_branch
        %248 = sbr.rel (%p246) target = $region32
      $region31: #{conv2d_subsampling.1} parent=11 // pred_region
        %p249 = scmp.lt.s32.totalorder %s23, 0
        %s250 = scalar_select %p249, %s23, 0
        %s251 = smul.addr %s250, 8
        %s252 = scalar_lea.vmem %s6, %s251
      $region32: #{conv2d_subsampling.1} parent=11 // pred_fallthru
        _
    $region12: #{conv2d_subsampling.1} parent=5 // pred_fallthru
      _
    %p253 = scmp.lt.s32.totalorder %s13, 2
    // Predicated region
    $region33: #{conv2d_subsampling.1} parent=5 // pred_check
      %p254 = pneg %p253
    $region34: #{conv2d_subsampling.1} parent=5 // pred_check_branch
      %256 = sbr.rel (%p254) target = $region36
    $region35: #{conv2d_subsampling.1} parent=5 // pred_region
      // Predicated region
      $region37: #{conv2d_subsampling.1} parent=35 // pred_check
        %p257 = pneg %p47
      $region38: #{conv2d_subsampling.1} parent=35 // pred_check_branch
        %259 = sbr.rel (%p257) target = $region40
      $region39: #{conv2d_subsampling.1} parent=35 // pred_region
        %p260 = scmp.lt.s32.totalorder %s20, 1
        %s261 = scalar_select %p260, %s20, 1
        %p262 = scmp.lt.s32.totalorder %s21, 0
        %s263 = scalar_select %p262, %s21, 0
        %s264 = smul.addr %s263, 4
        %s265 = smul.addr %s261, 4
        %s266 = sadd.s32 %s264, %s265
        %s267 = smul.addr %s266, 4
        %s268 = scalar_lea.vmem %s0, %s267
      $region40: #{conv2d_subsampling.1} parent=35 // pred_fallthru
        _
      // Predicated region
      $region41: #{conv2d_subsampling.1} parent=35 // pred_check
        %p269 = pneg %p75
      $region42: #{conv2d_subsampling.1} parent=35 // pred_check_branch
        %271 = sbr.rel (%p269) target = $region44
      $region43: #{conv2d_subsampling.1} parent=35 // pred_region
        %p272 = scmp.lt.s32.totalorder %s20, 1
        %s273 = scalar_select %p272, %s20, 1
        %p274 = scmp.lt.s32.totalorder %s21, 0
        %s275 = scalar_select %p274, %s21, 0
        %s276 = smul.addr %s275, 2
        %s277 = smul.addr %s273, 2
        %s278 = sadd.s32 %s276, %s277
        %s279 = scalar_lea.vmem %s1, %s278
      $region44: #{conv2d_subsampling.1} parent=35 // pred_fallthru
        _
    $region36: #{conv2d_subsampling.1} parent=5 // pred_fallthru
      _
    %p280 = scmp.le.s32.totalorder 1, %s13
    %p281 = scmp.lt.s32.totalorder %s13, 3
    %p282 = pnand %p280, %p281
    %p283 = pneg %p282
    // Predicated region
    $region45: #{conv2d_subsampling.1} parent=5 // pred_check
      _
    $region46: #{conv2d_subsampling.1} parent=5 // pred_check_branch
      %285 = sbr.rel (%p282) target = $region48
    $region47: #{conv2d_subsampling.1} parent=5 // pred_region
      %s286 = ssub.s32 %s13, 1
      %p287 = scmp.lt.s32.totalorder %s22, 1
      %s288 = scalar_select %p287, %s22, 1
      %p289 = scmp.lt.s32.totalorder %s23, 0
      %s290 = scalar_select %p289, %s23, 0
      %s291 = smul.addr %s290, 4
      %s292 = smul.addr %s288, 4
      %s293 = sadd.s32 %s291, %s292
      %s294 = smul.addr %s293, 4
      %s295 = scalar_lea.vmem %s0, %s294
      %p296 = pneg %p53
      %p297 = pneg %p50
      %p298 = scmp.lt.s32.totalorder %s22, 1
      %s299 = scalar_select %p298, %s22, 1
      %p300 = scmp.lt.s32.totalorder %s23, 0
      %s301 = scalar_select %p300, %s23, 0
      %s302 = smul.addr %s301, 2
      %s303 = smul.addr %s299, 2
      %s304 = sadd.s32 %s302, %s303
      %s305 = scalar_lea.vmem %s1, %s304
      %p306 = pneg %p81
      %p307 = pneg %p78
      %p308 = pneg %p102
      %p309 = pneg %p99
      %p310 = pneg %p123
      %p311 = pneg %p120
      %p312 = pneg %p144
      %p313 = pneg %p141
      %p314 = pneg %p165
      %p315 = pneg %p162
      %p316 = scmp.lt.s32.totalorder %s23, 0
      %s317 = scalar_select %p316, %s23, 0
      %s318 = smul.addr %s317, 8
      %s319 = scalar_lea.vmem %s6, %s318
      %p320 = pneg %p191
      %p321 = pneg %p188
      %p322 = pneg %p219
      %p323 = pneg %p216
      %p324 = scmp.lt.s32.totalorder %s22, 1
      %s325 = scalar_select %p324, %s22, 1
      %p326 = scmp.lt.s32.totalorder %s23, 0
      %s327 = scalar_select %p326, %s23, 0
      %s328 = sadd.s32 %s327, %s325
      %s329 = smul.addr %s328, 8
      %s330 = scalar_lea.vmem %s7, %s329
      %p331 = scmp.lt.s32.totalorder %s22, 1
      %s332 = scalar_select %p331, %s22, 1
      %p333 = scmp.lt.s32.totalorder %s23, 0
      %s334 = scalar_select %p333, %s23, 0
      %s335 = smul.addr %s334, 4
      %s336 = smul.addr %s332, 4
      %s337 = sadd.s32 %s335, %s336
      %s338 = smul.addr %s337, 4
      %s339 = scalar_lea.vmem %s0, %s338
      %p340 = scmp.lt.s32.totalorder %s22, 1
      %s341 = scalar_select %p340, %s22, 1
      %p342 = scmp.lt.s32.totalorder %s23, 0
      %s343 = scalar_select %p342, %s23, 0
      %s344 = smul.addr %s343, 2
      %s345 = smul.addr %s341, 2
      %s346 = sadd.s32 %s344, %s345
      %s347 = scalar_lea.vmem %s1, %s346
      %p348 = scmp.lt.s32.totalorder %s23, 0
      %s349 = scalar_select %p348, %s23, 0
      %s350 = smul.addr %s349, 8
      %s351 = scalar_lea.vmem %s6, %s350
      %p352 = scmp.lt.s32.totalorder %s22, 1
      %s353 = scalar_select %p352, %s22, 1
      %p354 = scmp.lt.s32.totalorder %s23, 0
      %s355 = scalar_select %p354, %s23, 0
      %s356 = sadd.s32 %s355, %s353
      %s357 = smul.addr %s356, 8
      %s358 = scalar_lea.vmem %s7, %s357
      %v360 = vld [vmem:[%s2] sm:$0xf]
      %v361 = vld [vmem:[%s2 + $0x4] sm:$0xf]
      %v362 = vld [vmem:[%s2 + $0x8] sm:$0xf]
      %v363 = vld [vmem:[%s2 + $0xc] sm:$0xf]
      %v364 = vld [vmem:[%s2 + $0x10] sm:$0xf]
      %v365 = vld [vmem:[%s2 + $0x14] sm:$0xf]
      %v366 = vld [vmem:[%s2 + $0x18] sm:$0xf]
      %v367 = vld [vmem:[%s2 + $0x1c] sm:$0xf]
      %v368 = vld [vmem:[%s2 + $0x20] sm:$0xf]
      %v369 = vld [vmem:[%s2 + $0x24] sm:$0xf]
      %v370 = vld [vmem:[%s2 + $0x28] sm:$0xf]
      %v371 = vld [vmem:[%s2 + $0x2c] sm:$0xf]
      %v372 = vld [vmem:[%s339] sm:$0xf]
      %v385 = vunpack.c.l.b16 %v360
      %v386 = vunpack.c.l.b16 %v361
      %v387 = vunpack.c.l.b16 %v362
      %v388 = vunpack.c.l.b16 %v363
      %v389 = vunpack.c.l.b16 %v364
      %v390 = vunpack.c.l.b16 %v365
      %v391 = vunpack.c.l.b16 %v366
      %v392 = vunpack.c.l.b16 %v367
      %v393 = vunpack.c.l.b16 %v368
      %v394 = vunpack.c.l.b16 %v369
      %v395 = vunpack.c.l.b16 %v370
      %v396 = vunpack.c.l.b16 %v371
      %v397 = vpack.c.b16 %v386, %v385
      %v398 = vpack.c.b16 %v388, %v387
      %v399 = vpack.c.b16 %v390, %v389
      %v400 = vpack.c.b16 %v392, %v391
      %v401 = vpack.c.b16 %v394, %v393
      %v402 = vpack.c.b16 %v396, %v395
      %vm409 = vcmask 785408
      %v411 = vsel %vm409, %v372, 0
      %413 = vmatprep.subr.bf16.mxu0 0
      %414 = vmatpush1.bf16.msra.mxu0 0
      %415 = vmatprep.subr.bf16.mxu0 0
      %416 = vmatpush1.bf16.msra.mxu0 0
      %417 = vmatprep.subr.bf16.mxu0 0
      %418 = vmatpush1.bf16.msra.mxu0 %v402
      %419 = vmatprep.subr.bf16.mxu0 0
      %420 = vmatpush1.bf16.msra.mxu0 %v401
      %421 = vmatprep.subr.bf16.mxu0 0
      %422 = vmatpush1.bf16.msra.mxu0 %v400
      %423 = vmatprep.subr.bf16.mxu0 0
      %424 = vmatpush1.bf16.msra.mxu0 %v399
      %425 = vmatprep.subr.bf16.mxu0 0
      %426 = vmatpush1.bf16.msra.mxu0 %v398
      %427 = vmatprep.subr.bf16.mxu0 0
      %428 = vmatpush1.bf16.msra.mxu0 %v397
      %429 = vmatprep.subr.bf16.mxu0 0
      %430 = vmatpush2.bf16.msra.mxu0 0
      %431 = vmatprep.subr.bf16.mxu0 0
      %432 = vmatpush2.bf16.msra.mxu0 0
      %433 = vmatprep.subr.bf16.mxu0 0
      %434 = vmatpush2.bf16.msra.mxu0 0
      %435 = vmatprep.subr.bf16.mxu0 0
      %436 = vmatpush2.bf16.msra.mxu0 0
      %437 = vmatprep.subr.bf16.mxu0 0
      %438 = vmatpush2.bf16.msra.mxu0 0
      %439 = vmatprep.subr.bf16.mxu0 0
      %440 = vmatpush2.bf16.msra.mxu0 0
      %441 = vmatprep.subr.bf16.mxu0 0
      %442 = vmatpush2.bf16.msra.mxu0 0
      %443 = vmatprep.subr.bf16.mxu0 0
      %444 = vmatpush2.bf16.msra.mxu0 0
      %445 = vmatprep.mubr.bf16.mxu0 0
      %446 = vmatmul.mubr.bf16.gmra.mxu0 %v411
      %v447 = vpop.f32.mrf.mxu0
      %v448 = vadd.f32 0.0, %v447
      %v449 = vpop.f32.mrf.mxu0
      %v450 = vpop.f32.mrf.mxu0
      %v451 = vpop.f32.mrf.mxu0
      %452 = vdwg.mxu0
      %vm453 = vcmask 261120
      %454 = vst.msk [vmem:[#allocation2] sm:$0xff] %vm453, %v448
      %v455 = vld [vmem:[%s339] sm:$0xff]
      %v457 = vunpack.c.l.b16 %v455
      %v458 = vunpack.c.h.b16 %v455
      %v459 = vpack.c.b16 %v457, %v457
      %v460 = vpack.c.b16 %v458, %v458
      %461 = vrot.lane.b32.xlu0 %v459, 64
      %v462 = vpop.permute.xlu0 %461
      %463 = vrot.lane.b32.xlu0 %v460, 64
      %v464 = vpop.permute.xlu0 %463
      %vm465 = vcmask 523264
      %v466 = vsel %vm465, %v462, %v464
      %v468 = vsel %vm409, %v466, 0
      %470 = vmatprep.subr.bf16.mxu0 0
      %471 = vmatpush1.bf16.msra.mxu0 0
      %472 = vmatprep.subr.bf16.mxu0 0
      %473 = vmatpush1.bf16.msra.mxu0 0
      %474 = vmatprep.subr.bf16.mxu0 0
      %475 = vmatpush1.bf16.msra.mxu0 %v402
      %476 = vmatprep.subr.bf16.mxu0 0
      %477 = vmatpush1.bf16.msra.mxu0 %v401
      %478 = vmatprep.subr.bf16.mxu0 0
      %479 = vmatpush1.bf16.msra.mxu0 %v400
      %480 = vmatprep.subr.bf16.mxu0 0
      %481 = vmatpush1.bf16.msra.mxu0 %v399
      %482 = vmatprep.subr.bf16.mxu0 0
      %483 = vmatpush1.bf16.msra.mxu0 %v398
      %484 = vmatprep.subr.bf16.mxu0 0
      %485 = vmatpush1.bf16.msra.mxu0 %v397
      %486 = vmatprep.subr.bf16.mxu0 0
      %487 = vmatpush2.bf16.msra.mxu0 0
      %488 = vmatprep.subr.bf16.mxu0 0
      %489 = vmatpush2.bf16.msra.mxu0 0
      %490 = vmatprep.subr.bf16.mxu0 0
      %491 = vmatpush2.bf16.msra.mxu0 0
      %492 = vmatprep.subr.bf16.mxu0 0
      %493 = vmatpush2.bf16.msra.mxu0 0
      %494 = vmatprep.subr.bf16.mxu0 0
      %495 = vmatpush2.bf16.msra.mxu0 0
      %496 = vmatprep.subr.bf16.mxu0 0
      %497 = vmatpush2.bf16.msra.mxu0 0
      %498 = vmatprep.subr.bf16.mxu0 0
      %499 = vmatpush2.bf16.msra.mxu0 0
      %500 = vmatprep.subr.bf16.mxu0 0
      %501 = vmatpush2.bf16.msra.mxu0 0
      %502 = vmatprep.mubr.bf16.mxu0 0
      %503 = vmatmul.mubr.bf16.gmra.mxu0 %v468
      %v504 = vpop.f32.mrf.mxu0
      %v505 = vadd.f32 0.0, %v504
      %v506 = vpop.f32.mrf.mxu0
      %v507 = vpop.f32.mrf.mxu0
      %v508 = vpop.f32.mrf.mxu0
      %509 = vdwg.mxu0
      %511 = vrot.lane.b32.xlu0 %v505, 32
      %v512 = vpop.permute.xlu0 %511
      %vm514 = vcmask 523520
      %515 = vst.msk [vmem:[#allocation2] sm:$0xff] %vm514, %v512
      %v516 = vld [vmem:[%s339 + $0x4] sm:$0xf]
      %v518 = vsel %vm409, %v516, 0
      %520 = vmatprep.subr.bf16.mxu0 0
      %521 = vmatpush1.bf16.msra.mxu0 0
      %522 = vmatprep.subr.bf16.mxu0 0
      %523 = vmatpush1.bf16.msra.mxu0 0
      %524 = vmatprep.subr.bf16.mxu0 0
      %525 = vmatpush1.bf16.msra.mxu0 %v402
      %526 = vmatprep.subr.bf16.mxu0 0
      %527 = vmatpush1.bf16.msra.mxu0 %v401
      %528 = vmatprep.subr.bf16.mxu0 0
      %529 = vmatpush1.bf16.msra.mxu0 %v400
      %530 = vmatprep.subr.bf16.mxu0 0
      %531 = vmatpush1.bf16.msra.mxu0 %v399
      %532 = vmatprep.subr.bf16.mxu0 0
      %533 = vmatpush1.bf16.msra.mxu0 %v398
      %534 = vmatprep.subr.bf16.mxu0 0
      %535 = vmatpush1.bf16.msra.mxu0 %v397
      %536 = vmatprep.subr.bf16.mxu0 0
      %537 = vmatpush2.bf16.msra.mxu0 0
      %538 = vmatprep.subr.bf16.mxu0 0
      %539 = vmatpush2.bf16.msra.mxu0 0
      %540 = vmatprep.subr.bf16.mxu0 0
      %541 = vmatpush2.bf16.msra.mxu0 0
      %542 = vmatprep.subr.bf16.mxu0 0
      %543 = vmatpush2.bf16.msra.mxu0 0
      %544 = vmatprep.subr.bf16.mxu0 0
      %545 = vmatpush2.bf16.msra.mxu0 0
      %546 = vmatprep.subr.bf16.mxu0 0
      %547 = vmatpush2.bf16.msra.mxu0 0
      %548 = vmatprep.subr.bf16.mxu0 0
      %549 = vmatpush2.bf16.msra.mxu0 0
      %550 = vmatprep.subr.bf16.mxu0 0
      %551 = vmatpush2.bf16.msra.mxu0 0
      %552 = vmatprep.mubr.bf16.mxu0 0
      %553 = vmatmul.mubr.bf16.gmra.mxu0 %v518
      %v554 = vpop.f32.mrf.mxu0
      %v555 = vadd.f32 0.0, %v554
      %v556 = vpop.f32.mrf.mxu0
      %v557 = vpop.f32.mrf.mxu0
      %v558 = vpop.f32.mrf.mxu0
      %559 = vdwg.mxu0
      %561 = vrot.lane.b32.xlu0 %v555, 64
      %v562 = vpop.permute.xlu0 %561
      %vm564 = vcmask 785920
      %565 = vst.msk [vmem:[#allocation2] sm:$0xff] %vm564, %v562
      %s566 = scalar_lea.vmem %s2, 48
      %v567 = vld [vmem:[%s566] sm:$0xf]
      %v568 = vld [vmem:[%s566 + $0x4] sm:$0xf]
      %v569 = vld [vmem:[%s566 + $0x8] sm:$0xf]
      %v570 = vld [vmem:[%s566 + $0xc] sm:$0xf]
      %v571 = vld [vmem:[%s566 + $0x10] sm:$0xf]
      %v572 = vld [vmem:[%s566 + $0x14] sm:$0xf]
      %v573 = vld [vmem:[%s566 + $0x18] sm:$0xf]
      %v574 = vld [vmem:[%s566 + $0x1c] sm:$0xf]
      %v575 = vld [vmem:[%s566 + $0x20] sm:$0xf]
      %v576 = vld [vmem:[%s566 + $0x24] sm:$0xf]
      %v577 = vld [vmem:[%s566 + $0x28] sm:$0xf]
      %v578 = vld [vmem:[%s566 + $0x2c] sm:$0xf]
      %v579 = vld [vmem:[#allocation2] sm:$0xff]
      %v580 = vld [vmem:[%s339 + $0x4] sm:$0xff]
      %v582 = vunpack.c.l.b16 %v580
      %v583 = vunpack.c.h.b16 %v580
      %v584 = vpack.c.b16 %v582, %v582
      %v585 = vpack.c.b16 %v583, %v583
      %586 = vrot.lane.b32.xlu0 %v584, 32
      %v587 = vpop.permute.xlu0 %586
      %588 = vrot.lane.b32.xlu0 %v585, 32
      %v589 = vpop.permute.xlu0 %588
      %vm590 = vcmask 261120
      %v591 = vsel %vm590, %v587, %v589
      %v604 = vunpack.c.l.b16 %v567
      %v605 = vunpack.c.l.b16 %v568
      %v606 = vunpack.c.l.b16 %v569
      %v607 = vunpack.c.l.b16 %v570
      %v608 = vunpack.c.l.b16 %v571
      %v609 = vunpack.c.l.b16 %v572
      %v610 = vunpack.c.l.b16 %v573
      %v611 = vunpack.c.l.b16 %v574
      %v612 = vunpack.c.l.b16 %v575
      %v613 = vunpack.c.l.b16 %v576
      %v614 = vunpack.c.l.b16 %v577
      %v615 = vunpack.c.l.b16 %v578
      %v616 = vpack.c.b16 %v605, %v604
      %v617 = vpack.c.b16 %v607, %v606
      %v618 = vpack.c.b16 %v609, %v608
      %v619 = vpack.c.b16 %v611, %v610
      %v620 = vpack.c.b16 %v613, %v612
      %v621 = vpack.c.b16 %v615, %v614
      %v629 = vsel %vm409, %v591, 0
      %631 = vmatprep.subr.bf16.mxu0 0
      %632 = vmatpush1.bf16.msra.mxu0 0
      %633 = vmatprep.subr.bf16.mxu0 0
      %634 = vmatpush1.bf16.msra.mxu0 0
      %635 = vmatprep.subr.bf16.mxu0 0
      %636 = vmatpush1.bf16.msra.mxu0 %v621
      %637 = vmatprep.subr.bf16.mxu0 0
      %638 = vmatpush1.bf16.msra.mxu0 %v620
      %639 = vmatprep.subr.bf16.mxu0 0
      %640 = vmatpush1.bf16.msra.mxu0 %v619
      %641 = vmatprep.subr.bf16.mxu0 0
      %642 = vmatpush1.bf16.msra.mxu0 %v618
      %643 = vmatprep.subr.bf16.mxu0 0
      %644 = vmatpush1.bf16.msra.mxu0 %v617
      %645 = vmatprep.subr.bf16.mxu0 0
      %646 = vmatpush1.bf16.msra.mxu0 %v616
      %647 = vmatprep.subr.bf16.mxu0 0
      %648 = vmatpush2.bf16.msra.mxu0 0
      %649 = vmatprep.subr.bf16.mxu0 0
      %650 = vmatpush2.bf16.msra.mxu0 0
      %651 = vmatprep.subr.bf16.mxu0 0
      %652 = vmatpush2.bf16.msra.mxu0 0
      %653 = vmatprep.subr.bf16.mxu0 0
      %654 = vmatpush2.bf16.msra.mxu0 0
      %655 = vmatprep.subr.bf16.mxu0 0
      %656 = vmatpush2.bf16.msra.mxu0 0
      %657 = vmatprep.subr.bf16.mxu0 0
      %658 = vmatpush2.bf16.msra.mxu0 0
      %659 = vmatprep.subr.bf16.mxu0 0
      %660 = vmatpush2.bf16.msra.mxu0 0
      %661 = vmatprep.subr.bf16.mxu0 0
      %662 = vmatpush2.bf16.msra.mxu0 0
      %663 = vmatprep.mubr.bf16.mxu0 0
      %664 = vmatmul.mubr.bf16.gmra.mxu0 %v629
      %v665 = vpop.f32.mrf.mxu0
      %v666 = vadd.f32 0.0, %v665
      %v667 = vpop.f32.mrf.mxu0
      %v668 = vpop.f32.mrf.mxu0
      %v669 = vpop.f32.mrf.mxu0
      %670 = vdwg.mxu0
      %v671 = vadd.f32 %v579, %v666
      %672 = vst.msk [vmem:[#allocation2] sm:$0xff] %vm453, %v671
      %v673 = vld [vmem:[#allocation2] sm:$0xff]
      %v674 = vld [vmem:[%s339 + $0x8] sm:$0xf]
      %v676 = vunpack.c.l.b16 %v674
      %v677 = vpack.c.b16 %v676, %v676
      %678 = vrot.lane.b32.xlu0 %v677, 96
      %v679 = vpop.permute.xlu0 %678
      %v681 = vsel %vm409, %v679, 0
      %683 = vmatprep.subr.bf16.mxu0 0
      %684 = vmatpush1.bf16.msra.mxu0 0
      %685 = vmatprep.subr.bf16.mxu0 0
      %686 = vmatpush1.bf16.msra.mxu0 0
      %687 = vmatprep.subr.bf16.mxu0 0
      %688 = vmatpush1.bf16.msra.mxu0 %v621
      %689 = vmatprep.subr.bf16.mxu0 0
      %690 = vmatpush1.bf16.msra.mxu0 %v620
      %691 = vmatprep.subr.bf16.mxu0 0
      %692 = vmatpush1.bf16.msra.mxu0 %v619
      %693 = vmatprep.subr.bf16.mxu0 0
      %694 = vmatpush1.bf16.msra.mxu0 %v618
      %695 = vmatprep.subr.bf16.mxu0 0
      %696 = vmatpush1.bf16.msra.mxu0 %v617
      %697 = vmatprep.subr.bf16.mxu0 0
      %698 = vmatpush1.bf16.msra.mxu0 %v616
      %699 = vmatprep.subr.bf16.mxu0 0
      %700 = vmatpush2.bf16.msra.mxu0 0
      %701 = vmatprep.subr.bf16.mxu0 0
      %702 = vmatpush2.bf16.msra.mxu0 0
      %703 = vmatprep.subr.bf16.mxu0 0
      %704 = vmatpush2.bf16.msra.mxu0 0
      %705 = vmatprep.subr.bf16.mxu0 0
      %706 = vmatpush2.bf16.msra.mxu0 0
      %707 = vmatprep.subr.bf16.mxu0 0
      %708 = vmatpush2.bf16.msra.mxu0 0
      %709 = vmatprep.subr.bf16.mxu0 0
      %710 = vmatpush2.bf16.msra.mxu0 0
      %711 = vmatprep.subr.bf16.mxu0 0
      %712 = vmatpush2.bf16.msra.mxu0 0
      %713 = vmatprep.subr.bf16.mxu0 0
      %714 = vmatpush2.bf16.msra.mxu0 0
      %715 = vmatprep.mubr.bf16.mxu0 0
      %716 = vmatmul.mubr.bf16.gmra.mxu0 %v681
      %v717 = vpop.f32.mrf.mxu0
      %v718 = vadd.f32 0.0, %v717
      %v719 = vpop.f32.mrf.mxu0
      %v720 = vpop.f32.mrf.mxu0
      %v721 = vpop.f32.mrf.mxu0
      %722 = vdwg.mxu0
      %724 = vrot.lane.b32.xlu0 %v718, 32
      %v725 = vpop.permute.xlu0 %724
      %v727 = vadd.f32 %v673, %v725
      %728 = vst.msk [vmem:[#allocation2] sm:$0xff] %vm514, %v727
      %v729 = vld [vmem:[#allocation2] sm:$0xff]
      %v730 = vld [vmem:[%s339 + $0x8] sm:$0xff]
      %v732 = vunpack.c.l.b16 %v730
      %v733 = vunpack.c.h.b16 %v730
      %v734 = vpack.c.b16 %v732, %v732
      %v735 = vpack.c.b16 %v733, %v733
      %736 = vrot.lane.b32.xlu0 %v734, 32
      %v737 = vpop.permute.xlu0 %736
      %738 = vrot.lane.b32.xlu0 %v735, 32
      %v739 = vpop.permute.xlu0 %738
      %v740 = vsel %vm590, %v737, %v739
      %v742 = vsel %vm409, %v740, 0
      %744 = vmatprep.subr.bf16.mxu0 0
      %745 = vmatpush1.bf16.msra.mxu0 0
      %746 = vmatprep.subr.bf16.mxu0 0
      %747 = vmatpush1.bf16.msra.mxu0 0
      %748 = vmatprep.subr.bf16.mxu0 0
      %749 = vmatpush1.bf16.msra.mxu0 %v621
      %750 = vmatprep.subr.bf16.mxu0 0
      %751 = vmatpush1.bf16.msra.mxu0 %v620
      %752 = vmatprep.subr.bf16.mxu0 0
      %753 = vmatpush1.bf16.msra.mxu0 %v619
      %754 = vmatprep.subr.bf16.mxu0 0
      %755 = vmatpush1.bf16.msra.mxu0 %v618
      %756 = vmatprep.subr.bf16.mxu0 0
      %757 = vmatpush1.bf16.msra.mxu0 %v617
      %758 = vmatprep.subr.bf16.mxu0 0
      %759 = vmatpush1.bf16.msra.mxu0 %v616
      %760 = vmatprep.subr.bf16.mxu0 0
      %761 = vmatpush2.bf16.msra.mxu0 0
      %762 = vmatprep.subr.bf16.mxu0 0
      %763 = vmatpush2.bf16.msra.mxu0 0
      %764 = vmatprep.subr.bf16.mxu0 0
      %765 = vmatpush2.bf16.msra.mxu0 0
      %766 = vmatprep.subr.bf16.mxu0 0
      %767 = vmatpush2.bf16.msra.mxu0 0
      %768 = vmatprep.subr.bf16.mxu0 0
      %769 = vmatpush2.bf16.msra.mxu0 0
      %770 = vmatprep.subr.bf16.mxu0 0
      %771 = vmatpush2.bf16.msra.mxu0 0
      %772 = vmatprep.subr.bf16.mxu0 0
      %773 = vmatpush2.bf16.msra.mxu0 0
      %774 = vmatprep.subr.bf16.mxu0 0
      %775 = vmatpush2.bf16.msra.mxu0 0
      %776 = vmatprep.mubr.bf16.mxu0 0
      %777 = vmatmul.mubr.bf16.gmra.mxu0 %v742
      %v778 = vpop.f32.mrf.mxu0
      %v779 = vadd.f32 0.0, %v778
      %v780 = vpop.f32.mrf.mxu0
      %v781 = vpop.f32.mrf.mxu0
      %v782 = vpop.f32.mrf.mxu0
      %783 = vdwg.mxu0
      %785 = vrot.lane.b32.xlu0 %v779, 64
      %v786 = vpop.permute.xlu0 %785
      %v788 = vadd.f32 %v729, %v786
      %789 = vst.msk [vmem:[#allocation2] sm:$0xff] %vm564, %v788
      %s790 = scalar_lea.vmem %s2, 96
      %v791 = vld [vmem:[%s790] sm:$0xf]
      %v792 = vld [vmem:[%s790 + $0x4] sm:$0xf]
      %v793 = vld [vmem:[%s790 + $0x8] sm:$0xf]
      %v794 = vld [vmem:[%s790 + $0xc] sm:$0xf]
      %v795 = vld [vmem:[%s790 + $0x10] sm:$0xf]
      %v796 = vld [vmem:[%s790 + $0x14] sm:$0xf]
      %v797 = vld [vmem:[%s790 + $0x18] sm:$0xf]
      %v798 = vld [vmem:[%s790 + $0x1c] sm:$0xf]
      %v799 = vld [vmem:[%s790 + $0x20] sm:$0xf]
      %v800 = vld [vmem:[%s790 + $0x24] sm:$0xf]
      %v801 = vld [vmem:[%s790 + $0x28] sm:$0xf]
      %v802 = vld [vmem:[%s790 + $0x2c] sm:$0xf]
      %v803 = vld [vmem:[%s347] sm:$0x3]
      %v804 = vld [vmem:[%s339] sm:$0xf]
      %v817 = vunpack.c.l.b16 %v791
      %v818 = vunpack.c.l.b16 %v792
      %v819 = vunpack.c.l.b16 %v793
      %v820 = vunpack.c.l.b16 %v794
      %v821 = vunpack.c.l.b16 %v795
      %v822 = vunpack.c.l.b16 %v796
      %v823 = vunpack.c.l.b16 %v797
      %v824 = vunpack.c.l.b16 %v798
      %v825 = vunpack.c.l.b16 %v799
      %v826 = vunpack.c.l.b16 %v800
      %v827 = vunpack.c.l.b16 %v801
      %v828 = vunpack.c.l.b16 %v802
      %v829 = vpack.c.b16 %v818, %v817
      %v830 = vpack.c.b16 %v820, %v819
      %v831 = vpack.c.b16 %v822, %v821
      %v832 = vpack.c.b16 %v824, %v823
      %v833 = vpack.c.b16 %v826, %v825
      %v834 = vpack.c.b16 %v828, %v827
      %v842 = vsel %vm409, %v804, 0
      %844 = vmatprep.subr.bf16.mxu0 0
      %845 = vmatpush1.bf16.msra.mxu0 0
      %846 = vmatprep.subr.bf16.mxu0 0
      %847 = vmatpush1.bf16.msra.mxu0 0
      %848 = vmatprep.subr.bf16.mxu0 0
      %849 = vmatpush1.bf16.msra.mxu0 %v834
      %850 = vmatprep.subr.bf16.mxu0 0
      %851 = vmatpush1.bf16.msra.mxu0 %v833
      %852 = vmatprep.subr.bf16.mxu0 0
      %853 = vmatpush1.bf16.msra.mxu0 %v832
      %854 = vmatprep.subr.bf16.mxu0 0
      %855 = vmatpush1.bf16.msra.mxu0 %v831
      %856 = vmatprep.subr.bf16.mxu0 0
      %857 = vmatpush1.bf16.msra.mxu0 %v830
      %858 = vmatprep.subr.bf16.mxu0 0
      %859 = vmatpush1.bf16.msra.mxu0 %v829
      %860 = vmatprep.subr.bf16.mxu0 0
      %861 = vmatpush2.bf16.msra.mxu0 0
      %862 = vmatprep.subr.bf16.mxu0 0
      %863 = vmatpush2.bf16.msra.mxu0 0
      %864 = vmatprep.subr.bf16.mxu0 0
      %865 = vmatpush2.bf16.msra.mxu0 0
      %866 = vmatprep.subr.bf16.mxu0 0
      %867 = vmatpush2.bf16.msra.mxu0 0
      %868 = vmatprep.subr.bf16.mxu0 0
      %869 = vmatpush2.bf16.msra.mxu0 0
      %870 = vmatprep.subr.bf16.mxu0 0
      %871 = vmatpush2.bf16.msra.mxu0 0
      %872 = vmatprep.subr.bf16.mxu0 0
      %873 = vmatpush2.bf16.msra.mxu0 0
      %874 = vmatprep.subr.bf16.mxu0 0
      %875 = vmatpush2.bf16.msra.mxu0 0
      %876 = vmatprep.mubr.bf16.mxu0 0
      %877 = vmatmul.mubr.bf16.gmra.mxu0 %v842
      %v878 = vpop.f32.mrf.mxu0
      %v879 = vadd.f32 0.0, %v878
      %v880 = vpop.f32.mrf.mxu0
      %v881 = vpop.f32.mrf.mxu0
      %v882 = vpop.f32.mrf.mxu0
      %883 = vdwg.mxu0
      %v885 = vsel %vm409, %v803, 0
      %887 = vmatprep.subr.bf16.mxu0 0
      %888 = vmatpush1.bf16.msra.mxu0 0
      %889 = vmatprep.subr.bf16.mxu0 0
      %890 = vmatpush1.bf16.msra.mxu0 0
      %891 = vmatprep.subr.bf16.mxu0 0
      %892 = vmatpush1.bf16.msra.mxu0 %v834
      %893 = vmatprep.subr.bf16.mxu0 0
      %894 = vmatpush1.bf16.msra.mxu0 %v833
      %895 = vmatprep.subr.bf16.mxu0 0
      %896 = vmatpush1.bf16.msra.mxu0 %v832
      %897 = vmatprep.subr.bf16.mxu0 0
      %898 = vmatpush1.bf16.msra.mxu0 %v831
      %899 = vmatprep.subr.bf16.mxu0 0
      %900 = vmatpush1.bf16.msra.mxu0 %v830
      %901 = vmatprep.subr.bf16.mxu0 0
      %902 = vmatpush1.bf16.msra.mxu0 %v829
      %903 = vmatprep.subr.bf16.mxu0 0
      %904 = vmatpush2.bf16.msra.mxu0 0
      %905 = vmatprep.subr.bf16.mxu0 0
      %906 = vmatpush2.bf16.msra.mxu0 0
      %907 = vmatprep.subr.bf16.mxu0 0
      %908 = vmatpush2.bf16.msra.mxu0 0
      %909 = vmatprep.subr.bf16.mxu0 0
      %910 = vmatpush2.bf16.msra.mxu0 0
      %911 = vmatprep.subr.bf16.mxu0 0
      %912 = vmatpush2.bf16.msra.mxu0 0
      %913 = vmatprep.subr.bf16.mxu0 0
      %914 = vmatpush2.bf16.msra.mxu0 0
      %915 = vmatprep.subr.bf16.mxu0 0
      %916 = vmatpush2.bf16.msra.mxu0 0
      %917 = vmatprep.subr.bf16.mxu0 0
      %918 = vmatpush2.bf16.msra.mxu0 0
      %919 = vmatprep.mubr.bf16.mxu0 0
      %920 = vmatmul.mubr.bf16.gmra.mxu0 %v885
      %v921 = vpop.f32.mrf.mxu0
      %v922 = vadd.f32 0.0, %v921
      %v923 = vpop.f32.mrf.mxu0
      %v924 = vpop.f32.mrf.mxu0
      %v925 = vpop.f32.mrf.mxu0
      %926 = vdwg.mxu0
      %v927 = vld [vmem:[#allocation2] sm:$0xff]
      %v929 = vrot.slane %v879, 1
      %v932 = vrot.slane %v922, 1
      %vm934 = vcmask 1046528
      %v935 = vsel %vm934, %v929, %v932
      %v936 = vadd.f32 %v927, %v935
      %937 = vst.msk [vmem:[#allocation2] sm:$0xff] %vm453, %v936
      %v938 = vld [vmem:[%s339] sm:$0xff]
      %v940 = vunpack.c.l.b16 %v938
      %v941 = vunpack.c.h.b16 %v938
      %v942 = vpack.c.b16 %v940, %v940
      %v943 = vpack.c.b16 %v941, %v941
      %944 = vrot.lane.b32.xlu0 %v942, 64
      %v945 = vpop.permute.xlu0 %944
      %946 = vrot.lane.b32.xlu0 %v943, 64
      %v947 = vpop.permute.xlu0 %946
      %v948 = vsel %vm465, %v945, %v947
      %v950 = vsel %vm409, %v948, 0
      %952 = vmatprep.subr.bf16.mxu0 0
      %953 = vmatpush1.bf16.msra.mxu0 0
      %954 = vmatprep.subr.bf16.mxu0 0
      %955 = vmatpush1.bf16.msra.mxu0 0
      %956 = vmatprep.subr.bf16.mxu0 0
      %957 = vmatpush1.bf16.msra.mxu0 %v834
      %958 = vmatprep.subr.bf16.mxu0 0
      %959 = vmatpush1.bf16.msra.mxu0 %v833
      %960 = vmatprep.subr.bf16.mxu0 0
      %961 = vmatpush1.bf16.msra.mxu0 %v832
      %962 = vmatprep.subr.bf16.mxu0 0
      %963 = vmatpush1.bf16.msra.mxu0 %v831
      %964 = vmatprep.subr.bf16.mxu0 0
      %965 = vmatpush1.bf16.msra.mxu0 %v830
      %966 = vmatprep.subr.bf16.mxu0 0
      %967 = vmatpush1.bf16.msra.mxu0 %v829
      %968 = vmatprep.subr.bf16.mxu0 0
      %969 = vmatpush2.bf16.msra.mxu0 0
      %970 = vmatprep.subr.bf16.mxu0 0
      %971 = vmatpush2.bf16.msra.mxu0 0
      %972 = vmatprep.subr.bf16.mxu0 0
      %973 = vmatpush2.bf16.msra.mxu0 0
      %974 = vmatprep.subr.bf16.mxu0 0
      %975 = vmatpush2.bf16.msra.mxu0 0
      %976 = vmatprep.subr.bf16.mxu0 0
      %977 = vmatpush2.bf16.msra.mxu0 0
      %978 = vmatprep.subr.bf16.mxu0 0
      %979 = vmatpush2.bf16.msra.mxu0 0
      %980 = vmatprep.subr.bf16.mxu0 0
      %981 = vmatpush2.bf16.msra.mxu0 0
      %982 = vmatprep.subr.bf16.mxu0 0
      %983 = vmatpush2.bf16.msra.mxu0 0
      %984 = vmatprep.mubr.bf16.mxu0 0
      %985 = vmatmul.mubr.bf16.gmra.mxu0 %v950
      %v986 = vpop.f32.mrf.mxu0
      %v987 = vadd.f32 0.0, %v986
      %v988 = vpop.f32.mrf.mxu0
      %v989 = vpop.f32.mrf.mxu0
      %v990 = vpop.f32.mrf.mxu0
      %991 = vdwg.mxu0
      %v994 = vunpack.c.l.s4 1966171168
      %v995 = vunpack.c.0.s8 %v994
      %v996 = vlaneseq
      %v997 = vshrl.u32 %v996, 7
      %v998 = vsub.s32 %v995, %v997
      %v999 = vrot.slane %v803, %v998
      %v1000 = vcombine.high %v999, %v999
      %v1002 = vunpack.c.l.s4 1966171168
      %v1003 = vunpack.c.0.s8 %v1002
      %v1004 = vlaneseq
      %v1005 = vshrl.u32 %v1004, 7
      %v1006 = vsub.s32 %v1003, %v1005
      %v1007 = vrot.slane %v999, %v1006
      %v1009 = vunpack.c.l.s4 1966171168
      %v1010 = vunpack.c.0.s8 %v1009
      %v1011 = vlaneseq
      %v1012 = vshrl.u32 %v1011, 7
      %v1013 = vsub.s32 %v1010, %v1012
      %v1014 = vrot.slane %v1000, %v1013
      %1015 = vrot.lane.b32.xlu0 %v1007, 64
      %v1016 = vpop.permute.xlu0 %1015
      %1017 = vrot.lane.b32.xlu0 %v1014, 64
      %v1018 = vpop.permute.xlu0 %1017
      %v1019 = vsel %vm465, %v1016, %v1018
      %v1021 = vsel %vm409, %v1019, 0
      %1023 = vmatprep.subr.bf16.mxu0 0
      %1024 = vmatpush1.bf16.msra.mxu0 0
      %1025 = vmatprep.subr.bf16.mxu0 0
      %1026 = vmatpush1.bf16.msra.mxu0 0
      %1027 = vmatprep.subr.bf16.mxu0 0
      %1028 = vmatpush1.bf16.msra.mxu0 %v834
      %1029 = vmatprep.subr.bf16.mxu0 0
      %1030 = vmatpush1.bf16.msra.mxu0 %v833
      %1031 = vmatprep.subr.bf16.mxu0 0
      %1032 = vmatpush1.bf16.msra.mxu0 %v832
      %1033 = vmatprep.subr.bf16.mxu0 0
      %1034 = vmatpush1.bf16.msra.mxu0 %v831
      %1035 = vmatprep.subr.bf16.mxu0 0
      %1036 = vmatpush1.bf16.msra.mxu0 %v830
      %1037 = vmatprep.subr.bf16.mxu0 0
      %1038 = vmatpush1.bf16.msra.mxu0 %v829
      %1039 = vmatprep.subr.bf16.mxu0 0
      %1040 = vmatpush2.bf16.msra.mxu0 0
      %1041 = vmatprep.subr.bf16.mxu0 0
      %1042 = vmatpush2.bf16.msra.mxu0 0
      %1043 = vmatprep.subr.bf16.mxu0 0
      %1044 = vmatpush2.bf16.msra.mxu0 0
      %1045 = vmatprep.subr.bf16.mxu0 0
      %1046 = vmatpush2.bf16.msra.mxu0 0
      %1047 = vmatprep.subr.bf16.mxu0 0
      %1048 = vmatpush2.bf16.msra.mxu0 0
      %1049 = vmatprep.subr.bf16.mxu0 0
      %1050 = vmatpush2.bf16.msra.mxu0 0
      %1051 = vmatprep.subr.bf16.mxu0 0
      %1052 = vmatpush2.bf16.msra.mxu0 0
      %1053 = vmatprep.subr.bf16.mxu0 0
      %1054 = vmatpush2.bf16.msra.mxu0 0
      %1055 = vmatprep.mubr.bf16.mxu0 0
      %1056 = vmatmul.mubr.bf16.gmra.mxu0 %v1021
      %v1057 = vpop.f32.mrf.mxu0
      %v1058 = vadd.f32 0.0, %v1057
      %v1059 = vpop.f32.mrf.mxu0
      %v1060 = vpop.f32.mrf.mxu0
      %v1061 = vpop.f32.mrf.mxu0
      %1062 = vdwg.mxu0
      %v1063 = vld [vmem:[#allocation2] sm:$0xff]
      %v1065 = vrot.slane %v987, 1
      %v1068 = vrot.slane %v1058, 1
      %v1070 = vsel %vm934, %v1065, %v1068
      %1072 = vrot.lane.b32.xlu0 %v1070, 32
      %v1073 = vpop.permute.xlu0 %1072
      %v1075 = vadd.f32 %v1063, %v1073
      %1076 = vst.msk [vmem:[#allocation2] sm:$0xff] %vm514, %v1075
      %v1077 = vld [vmem:[%s339 + $0x4] sm:$0xf]
      %v1079 = vsel %vm409, %v1077, 0
      %1081 = vmatprep.subr.bf16.mxu0 0
      %1082 = vmatpush1.bf16.msra.mxu0 0
      %1083 = vmatprep.subr.bf16.mxu0 0
      %1084 = vmatpush1.bf16.msra.mxu0 0
      %1085 = vmatprep.subr.bf16.mxu0 0
      %1086 = vmatpush1.bf16.msra.mxu0 %v834
      %1087 = vmatprep.subr.bf16.mxu0 0
      %1088 = vmatpush1.bf16.msra.mxu0 %v833
      %1089 = vmatprep.subr.bf16.mxu0 0
      %1090 = vmatpush1.bf16.msra.mxu0 %v832
      %1091 = vmatprep.subr.bf16.mxu0 0
      %1092 = vmatpush1.bf16.msra.mxu0 %v831
      %1093 = vmatprep.subr.bf16.mxu0 0
      %1094 = vmatpush1.bf16.msra.mxu0 %v830
      %1095 = vmatprep.subr.bf16.mxu0 0
      %1096 = vmatpush1.bf16.msra.mxu0 %v829
      %1097 = vmatprep.subr.bf16.mxu0 0
      %1098 = vmatpush2.bf16.msra.mxu0 0
      %1099 = vmatprep.subr.bf16.mxu0 0
      %1100 = vmatpush2.bf16.msra.mxu0 0
      %1101 = vmatprep.subr.bf16.mxu0 0
      %1102 = vmatpush2.bf16.msra.mxu0 0
      %1103 = vmatprep.subr.bf16.mxu0 0
      %1104 = vmatpush2.bf16.msra.mxu0 0
      %1105 = vmatprep.subr.bf16.mxu0 0
      %1106 = vmatpush2.bf16.msra.mxu0 0
      %1107 = vmatprep.subr.bf16.mxu0 0
      %1108 = vmatpush2.bf16.msra.mxu0 0
      %1109 = vmatprep.subr.bf16.mxu0 0
      %1110 = vmatpush2.bf16.msra.mxu0 0
      %1111 = vmatprep.subr.bf16.mxu0 0
      %1112 = vmatpush2.bf16.msra.mxu0 0
      %1113 = vmatprep.mubr.bf16.mxu0 0
      %1114 = vmatmul.mubr.bf16.gmra.mxu0 %v1079
      %v1115 = vpop.f32.mrf.mxu0
      %v1116 = vadd.f32 0.0, %v1115
      %v1117 = vpop.f32.mrf.mxu0
      %v1118 = vpop.f32.mrf.mxu0
      %v1119 = vpop.f32.mrf.mxu0
      %1120 = vdwg.mxu0
      %v1122 = vsel %vm409, %v1014, 0
      %1124 = vmatprep.subr.bf16.mxu0 0
      %1125 = vmatpush1.bf16.msra.mxu0 0
      %1126 = vmatprep.subr.bf16.mxu0 0
      %1127 = vmatpush1.bf16.msra.mxu0 0
      %1128 = vmatprep.subr.bf16.mxu0 0
      %1129 = vmatpush1.bf16.msra.mxu0 %v834
      %1130 = vmatprep.subr.bf16.mxu0 0
      %1131 = vmatpush1.bf16.msra.mxu0 %v833
      %1132 = vmatprep.subr.bf16.mxu0 0
      %1133 = vmatpush1.bf16.msra.mxu0 %v832
      %1134 = vmatprep.subr.bf16.mxu0 0
      %1135 = vmatpush1.bf16.msra.mxu0 %v831
      %1136 = vmatprep.subr.bf16.mxu0 0
      %1137 = vmatpush1.bf16.msra.mxu0 %v830
      %1138 = vmatprep.subr.bf16.mxu0 0
      %1139 = vmatpush1.bf16.msra.mxu0 %v829
      %1140 = vmatprep.subr.bf16.mxu0 0
      %1141 = vmatpush2.bf16.msra.mxu0 0
      %1142 = vmatprep.subr.bf16.mxu0 0
      %1143 = vmatpush2.bf16.msra.mxu0 0
      %1144 = vmatprep.subr.bf16.mxu0 0
      %1145 = vmatpush2.bf16.msra.mxu0 0
      %1146 = vmatprep.subr.bf16.mxu0 0
      %1147 = vmatpush2.bf16.msra.mxu0 0
      %1148 = vmatprep.subr.bf16.mxu0 0
      %1149 = vmatpush2.bf16.msra.mxu0 0
      %1150 = vmatprep.subr.bf16.mxu0 0
      %1151 = vmatpush2.bf16.msra.mxu0 0
      %1152 = vmatprep.subr.bf16.mxu0 0
      %1153 = vmatpush2.bf16.msra.mxu0 0
      %1154 = vmatprep.subr.bf16.mxu0 0
      %1155 = vmatpush2.bf16.msra.mxu0 0
      %1156 = vmatprep.mubr.bf16.mxu0 0
      %1157 = vmatmul.mubr.bf16.gmra.mxu0 %v1122
      %v1158 = vpop.f32.mrf.mxu0
      %v1159 = vadd.f32 0.0, %v1158
      %v1160 = vpop.f32.mrf.mxu0
      %v1161 = vpop.f32.mrf.mxu0
      %v1162 = vpop.f32.mrf.mxu0
      %1163 = vdwg.mxu0
      %v1164 = vld [vmem:[#allocation2] sm:$0xff]
      %v1166 = vrot.slane %v1116, 1
      %v1169 = vrot.slane %v1159, 1
      %v1171 = vsel %vm934, %v1166, %v1169
      %1173 = vrot.lane.b32.xlu0 %v1171, 64
      %v1174 = vpop.permute.xlu0 %1173
      %v1176 = vadd.f32 %v1164, %v1174
      %1177 = vst.msk [vmem:[#allocation2] sm:$0xff] %vm564, %v1176
      %v1178 = vld [vmem:[#allocation2] sm:$0xff]
      %v1179 = vld [vmem:[%s3] sm:$0x1]
      %v1181 = vlaneseq
      %v1182 = vshrl.u32 %v1181, 7
      %v1183 = vsub.s32 0, %v1182
      %v1184 = vrot.slane %v1179, %v1183
      %v1186 = vadd.f32 %v1178, %v1184
      %v1187 = vmax.f32 %v1186, 0.0
      %v1188 = vpack.c.bf16 %v1187, %v1187
      %v1189 = vld [vmem:[%s4] sm:$0xf]
      %v1190 = vld [vmem:[%s4 + $0x4] sm:$0xf]
      %v1191 = vld [vmem:[%s4 + $0x8] sm:$0xf]
      %v1192 = vld [vmem:[%s4 + $0xc] sm:$0xf]
      %v1193 = vld [vmem:[%s4 + $0x10] sm:$0xf]
      %v1194 = vld [vmem:[%s4 + $0x14] sm:$0xf]
      %v1195 = vld [vmem:[%s4 + $0x18] sm:$0xf]
      %v1196 = vld [vmem:[%s4 + $0x1c] sm:$0xf]
      %v1197 = vld [vmem:[%s4 + $0x20] sm:$0xf]
      %v1198 = vld [vmem:[%s4 + $0x24] sm:$0xf]
      %v1199 = vld [vmem:[%s4 + $0x28] sm:$0xf]
      %v1200 = vld [vmem:[%s4 + $0x2c] sm:$0xf]
      %v1201 = vld [vmem:[%s5] sm:$0x1]
      %v1203 = vlaneseq
      %v1204 = vshrl.u32 %v1203, 7
      %v1205 = vsub.s32 0, %v1204
      %v1206 = vrot.slane %v1201, %v1205
      %v1220 = vunpack.c.l.b16 %v1189
      %v1221 = vunpack.c.l.b16 %v1190
      %v1222 = vunpack.c.l.b16 %v1191
      %v1223 = vunpack.c.l.b16 %v1192
      %v1224 = vunpack.c.l.b16 %v1193
      %v1225 = vunpack.c.l.b16 %v1194
      %v1226 = vunpack.c.l.b16 %v1195
      %v1227 = vunpack.c.l.b16 %v1196
      %v1228 = vunpack.c.l.b16 %v1197
      %v1229 = vunpack.c.l.b16 %v1198
      %v1230 = vunpack.c.l.b16 %v1199
      %v1231 = vunpack.c.l.b16 %v1200
      %v1232 = vpack.c.b16 %v1221, %v1220
      %v1233 = vpack.c.b16 %v1223, %v1222
      %v1234 = vpack.c.b16 %v1225, %v1224
      %v1235 = vpack.c.b16 %v1227, %v1226
      %v1236 = vpack.c.b16 %v1229, %v1228
      %v1237 = vpack.c.b16 %v1231, %v1230
      %v1245 = vsel %vm409, %v1188, 0
      %1247 = vmatprep.subr.bf16.mxu0 0
      %1248 = vmatpush1.bf16.msra.mxu0 0
      %1249 = vmatprep.subr.bf16.mxu0 0
      %1250 = vmatpush1.bf16.msra.mxu0 0
      %1251 = vmatprep.subr.bf16.mxu0 0
      %1252 = vmatpush1.bf16.msra.mxu0 %v1237
      %1253 = vmatprep.subr.bf16.mxu0 0
      %1254 = vmatpush1.bf16.msra.mxu0 %v1236
      %1255 = vmatprep.subr.bf16.mxu0 0
      %1256 = vmatpush1.bf16.msra.mxu0 %v1235
      %1257 = vmatprep.subr.bf16.mxu0 0
      %1258 = vmatpush1.bf16.msra.mxu0 %v1234
      %1259 = vmatprep.subr.bf16.mxu0 0
      %1260 = vmatpush1.bf16.msra.mxu0 %v1233
      %1261 = vmatprep.subr.bf16.mxu0 0
      %1262 = vmatpush1.bf16.msra.mxu0 %v1232
      %1263 = vmatprep.subr.bf16.mxu0 0
      %1264 = vmatpush2.bf16.msra.mxu0 0
      %1265 = vmatprep.subr.bf16.mxu0 0
      %1266 = vmatpush2.bf16.msra.mxu0 0
      %1267 = vmatprep.subr.bf16.mxu0 0
      %1268 = vmatpush2.bf16.msra.mxu0 0
      %1269 = vmatprep.subr.bf16.mxu0 0
      %1270 = vmatpush2.bf16.msra.mxu0 0
      %1271 = vmatprep.subr.bf16.mxu0 0
      %1272 = vmatpush2.bf16.msra.mxu0 0
      %1273 = vmatprep.subr.bf16.mxu0 0
      %1274 = vmatpush2.bf16.msra.mxu0 0
      %1275 = vmatprep.subr.bf16.mxu0 0
      %1276 = vmatpush2.bf16.msra.mxu0 0
      %1277 = vmatprep.subr.bf16.mxu0 0
      %1278 = vmatpush2.bf16.msra.mxu0 0
      %1279 = vmatprep.mubr.bf16.mxu0 0
      %1280 = vmatmul.mubr.bf16.gmra.mxu0 %v1245
      %v1281 = vpop.f32.mrf.mxu0
      %v1282 = vadd.f32 %v1206, %v1281
      %v1283 = vpop.f32.mrf.mxu0
      %v1284 = vpop.f32.mrf.mxu0
      %v1285 = vpop.f32.mrf.mxu0
      %1286 = vdwg.mxu0
      %v1287 = vmul.f32 %v1282, 5.656854
      %v1288 = vld [vmem:[%s351] sm:$0xff]
      %v1289 = vadd.f32 %v1287, %v1288
      %1290 = vst.msk [vmem:[%s358] sm:$0xff] %vm453, %v1289
      %p1291 = scmp.lt.s32.totalorder %s22, 1
      %s1292 = scalar_select %p1291, %s22, 1
      %p1293 = scmp.lt.s32.totalorder %s23, 0
      %s1294 = scalar_select %p1293, %s23, 0
      %s1295 = sadd.s32 %s1294, %s1292
      %s1296 = smul.addr %s1295, 8
      %s1297 = scalar_lea.vmem %s7, %s1296
      // Predicated region
      $region49: #{conv2d_subsampling.1} parent=47 // pred_check
        %p1298 = pneg %p216
      $region50: #{conv2d_subsampling.1} parent=47 // pred_check_branch
        %1300 = sbr.rel (%p1298) target = $region52
      $region51: #{conv2d_subsampling.1} parent=47 // pred_region
        _
      $region52: #{conv2d_subsampling.1} parent=47 // pred_fallthru
        _
    $region48: #{conv2d_subsampling.1} parent=5 // pred_fallthru
      _
    %p1301 = scmp.le.s32.totalorder 2, %s13
    // Predicated region
    $region53: #{conv2d_subsampling.1} parent=5 // pred_check
      %p1302 = pneg %p1301
    $region54: #{conv2d_subsampling.1} parent=5 // pred_check_branch
      %1304 = sbr.rel (%p1302) target = $region56
    $region55: #{conv2d_subsampling.1} parent=5 // pred_region
      %s1305 = ssub.s32 %s13, 2
      // Predicated region
      $region57: #{conv2d_subsampling.1} parent=55 // pred_check
        %p1306 = pneg %p222
      $region58: #{conv2d_subsampling.1} parent=55 // pred_check_branch
        %1308 = sbr.rel (%p1306) target = $region60
      $region59: #{conv2d_subsampling.1} parent=55 // pred_region
        %p1309 = scmp.lt.s32.totalorder %s24, 1
        %s1310 = scalar_select %p1309, %s24, 1
        %p1311 = scmp.lt.s32.totalorder %s25, 0
        %s1312 = scalar_select %p1311, %s25, 0
        %s1313 = sadd.s32 %s1312, %s1310
        %s1314 = smul.addr %s1313, 8
        %s1315 = scalar_lea.vmem %s7, %s1314
      $region60: #{conv2d_subsampling.1} parent=55 // pred_fallthru
        _
    $region56: #{conv2d_subsampling.1} parent=5 // pred_fallthru
      _
  $region6: #{conv2d_subsampling.1} parent=0 // loop_footer
    %s17 = sadd.s32 1, %s13
  $region7: #{conv2d_subsampling.1} parent=0 // loop_footer_branch
    %12 = sbr.rel target = $region3
  $region8: #{conv2d_subsampling.1} parent=0 // loop_exit
    _

</llo_original>
